<compile_context>
chip_gen: v7x
topology: tpu7x:2x2x1
jax: 0.10.0
libtpu: 0.0.40
codegen_flags: <defaults>
</compile_context>

<pallas_src>
import functools
import math

import jax
import jax.numpy as jnp
from jax.experimental import pallas as pl
from jax.experimental.pallas import tpu as pltpu


_LANE = 128                  # TPU lane width (last-dim vreg width)
_SINGLE_BLOCK_MAX_B = 2048   # below this, run the whole batch as one grid step
_TILE_B = 256                # above it, 256 rows/step fills the 256-row MXU (v6e/v7x)


def _pad_lanes(n: int) -> int:
    return max(_LANE, ((n + _LANE - 1) // _LANE) * _LANE)


def _mlp_kernel(x_ref, w1_ref, b1_ref, w2_ref, b2_ref, w3_ref, b3_ref, out_ref,
                *, mode: str, out_dim: int, out_pad: int):
    x = x_ref[...]
    wdt = w1_ref.dtype  # matmul input dtype follows the stored weight dtype (f32 or bf16)

    h1 = jnp.dot(x.astype(wdt), w1_ref[...], preferred_element_type=jnp.float32)
    h1 = jnp.maximum(h1 + b1_ref[...], 0.0)                      # f32 elementwise
    h2 = jnp.dot(h1.astype(wdt), w2_ref[...], preferred_element_type=jnp.float32)
    h2 = jnp.maximum(h2 + b2_ref[...], 0.0)
    h3 = jnp.dot(h2.astype(wdt), w3_ref[...], preferred_element_type=jnp.float32)
    h3 = h3 + b3_ref[...]          # (tile_b, out_pad); lanes >= out_dim are exactly 0

    if mode in ("actor", "both"):
        # softmax over the *real* output lanes only (pad lanes masked out)
        lane = jax.lax.broadcasted_iota(jnp.int32, h3.shape, 1)
        z = jnp.where(lane < out_dim, h3, -1e30)
        m = jnp.max(z, axis=-1, keepdims=True)
        e = jnp.exp(z - m)                                    # pad lanes -> exactly 0
        s = jnp.sum(e, axis=-1, keepdims=True)
        # EUP reciprocal: effectively free (EUP slot idle while VPU does exp/ReLU work)
        probs = e * pl.reciprocal(s, approx=True)

    if mode == "critic":
        out_ref[...] = h3.astype(out_ref.dtype)
    elif mode == "actor":
        out_ref[...] = probs.astype(out_ref.dtype)
    else:  # "both": pack [critic logits | actor probs] into one lane-dense output
        out_ref[:, :out_pad] = h3.astype(out_ref.dtype)
        out_ref[:, out_pad:] = probs.astype(out_ref.dtype)


def _forward(x, params, *, mode: str):
    """Run the MLP kernel. mode in {"critic", "actor", "both"}."""
    assert mode in ("critic", "actor", "both")
    w1, b1 = params["w1"], params["b1"]   # (in,  h1p), (1, h1p)
    w2, b2 = params["w2"], params["b2"]   # (h1p, h2p), (1, h2p)
    w3, b3 = params["w3"], params["b3"]   # (h2p, outp), (1, outp)
    out_dim = params["out_dim"]           # logical (unpadded) output width, python int

    batch, in_dim = x.shape
    h1p, h2p, out_pad = w1.shape[1], w2.shape[1], w3.shape[1]

    # Single grid step for small/medium batches; tile at 256 rows only when the batch
    # is large enough that per-step compute hides the ~0.35us step overhead.
    tile_b = batch if batch <= _SINGLE_BLOCK_MAX_B else _TILE_B
    grid_b = pl.cdiv(batch, tile_b)       # ragged last block handled by Pallas (no jnp.pad)

    n_heads = 2 if mode == "both" else 1
    out_w = n_heads * out_pad             # packed, lane-dense output width

    x_spec = pl.BlockSpec((tile_b, in_dim), lambda i: (i, 0))
    out_spec = pl.BlockSpec((tile_b, out_w), lambda i: (i, 0))
    # Weights/biases: constant block index -> resident in VMEM across grid steps.
    full = lambda a: pl.BlockSpec(a.shape, lambda i: (0, 0))

    itemsize = jnp.dtype(w1.dtype).itemsize
    flops = 2 * batch * (in_dim * h1p + h1p * h2p + h2p * out_pad)
    transcendentals = batch * out_pad if mode != "critic" else 0
    bytes_accessed = (
        4 * batch * in_dim
        + itemsize * (in_dim * h1p + h1p * h2p + h2p * out_pad)
        + 4 * (h1p + h2p + out_pad)
        + 4 * batch * out_w
    )

    kernel = functools.partial(_mlp_kernel, mode=mode, out_dim=out_dim, out_pad=out_pad)
    packed = pl.pallas_call(
        kernel,
        out_shape=jax.ShapeDtypeStruct((batch, out_w), jnp.float32),
        grid=(grid_b,),
        in_specs=[
            x_spec,
            full(w1), full(b1),
            full(w2), full(b2),
            full(w3), full(b3),
        ],
        out_specs=out_spec,
        compiler_params=pltpu.CompilerParams(
            dimension_semantics=("parallel",),
        ),
        cost_estimate=pl.CostEstimate(
            flops=int(flops),
            transcendentals=int(transcendentals),
            bytes_accessed=int(bytes_accessed),
        ),
    )(x, w1, b1, w2, b2, w3, b3)

    if mode == "both":
        return packed[:, :out_dim], packed[:, out_pad:out_pad + out_dim]
    return packed[:, :out_dim]


def network_forward(x, params, *, actor: bool):
    """Single-head forward (matches `Network(..., actor=actor).forward(x)`)."""
    return _forward(x, params, mode="actor" if actor else "critic")


def network_forward_both(x, params):
    """Fused forward: returns (critic_logits, actor_probs) from ONE pallas_call."""
    return _forward(x, params, mode="both")


def init_params(key, input_dim, hidden_in_dim, hidden_out_dim, output_dim,
                weight_dtype=jnp.float32):
    """Deterministic init mirroring Network.reset_parameters().

    hidden_init uses weight.size()[0] == out_features as 'fan_in' (same quirk as the
    original code). Biases keep torch's default Linear init
    (uniform(-1/sqrt(in_features), +1/sqrt(in_features))).

    Weights are stored pre-transposed as (in, out) with the hidden/output feature dims
    zero-padded to a multiple of 128 lanes; biases as (1, out_padded). Padding is done
    here, once, so the forward wrapper emits no pad/transpose/reshape ops and every
    in-kernel store is lane-dense.
    """
    ks = jax.random.split(key, 6)

    def u(k, shape, lim):
        return jax.random.uniform(k, shape, jnp.float32, minval=-lim, maxval=lim)

    h1p = _pad_lanes(hidden_in_dim)
    h2p = _pad_lanes(hidden_out_dim)
    outp = _pad_lanes(output_dim)

    def pad2(a, rows, cols):
        return jnp.pad(a, ((0, rows - a.shape[0]), (0, cols - a.shape[1])))

    w1 = u(ks[0], (input_dim, hidden_in_dim), 1.0 / math.sqrt(hidden_in_dim))
    w2 = u(ks[1], (hidden_in_dim, hidden_out_dim), 1.0 / math.sqrt(hidden_out_dim))
    w3 = u(ks[2], (hidden_out_dim, output_dim), 0.001)
    b1 = u(ks[3], (1, hidden_in_dim), 1.0 / math.sqrt(input_dim))
    b2 = u(ks[4], (1, hidden_out_dim), 1.0 / math.sqrt(hidden_in_dim))
    b3 = u(ks[5], (1, output_dim), 1.0 / math.sqrt(hidden_out_dim))

    w1 = pad2(w1, input_dim, h1p).astype(weight_dtype)
    w2 = pad2(w2, h1p, h2p).astype(weight_dtype)
    w3 = pad2(w3, h2p, outp).astype(weight_dtype)
    b1 = pad2(b1, 1, h1p)   # biases stay f32: bias-add/ReLU/softmax are f32 everywhere
    b2 = pad2(b2, 1, h2p)
    b3 = pad2(b3, 1, outp)

    return dict(w1=w1, b1=b1, w2=w2, b2=b2, w3=w3, b3=b3, out_dim=int(output_dim))


def _ref_forward(x, p, actor):
    # Pure-JAX reference; padded weight columns are zero so the first out_dim lanes
    # match the unpadded PyTorch math exactly.
    out_dim = p["out_dim"]
    h1 = jax.nn.relu(x @ p["w1"].astype(jnp.float32) + p["b1"])
    h2 = jax.nn.relu(h1 @ p["w2"].astype(jnp.float32) + p["b2"])
    h3 = (h2 @ p["w3"].astype(jnp.float32) + p["b3"])[:, :out_dim]
    return jax.nn.softmax(h3, axis=1) if actor else h3


if __name__ == "__main__":
    key = jax.random.PRNGKey(0)
    kx, kp = jax.random.split(key)

    # Batched workload; small enough that the whole problem is ONE grid step.
    batch = 256
    input_dim, hidden_in_dim, hidden_out_dim, output_dim = 24, 32, 16, 4

    x = jax.random.normal(kx, (batch, input_dim), jnp.float32)
    params = init_params(kp, input_dim, hidden_in_dim, hidden_out_dim, output_dim)
    # TODO(synk): switch to weight_dtype=jnp.bfloat16 for deployment once the batch is
    # large enough that the matmuls (not launch overhead) dominate.

    # Fused actor+critic: one kernel launch, one set of weight DMAs / matmuls,
    # one packed lane-dense output.
    out_critic, out_actor = network_forward_both(x, params)
    jax.block_until_ready((out_critic, out_actor))

    # sanity-check against pure-JAX reference
    ref_c = _ref_forward(x, params, False)
    ref_a = _ref_forward(x, params, True)
    assert out_critic.shape == (batch, output_dim)
    assert out_actor.shape == (batch, output_dim)
    # critic path is pure f32 matmul chain -> tight tolerance
    assert jnp.allclose(out_critic, ref_c, atol=1e-5, rtol=1e-5)
    # actor path uses the EUP approximate reciprocal -> slightly looser tolerance
    assert jnp.allclose(out_actor, ref_a, atol=2e-3, rtol=2e-3)
    assert jnp.allclose(out_actor.sum(axis=1), jnp.ones((batch,)), atol=5e-3)

    print("KERNEL_OK")
</pallas_src>

<mosaic_0001>
module attributes {stable_mosaic.version = 11 : i64} {
  func.func @_mlp_kernel(%arg0: i32, %arg1: memref<256x24xf32, #tpu.memory_space<vmem>>, %arg2: memref<24x128xf32, #tpu.memory_space<vmem>>, %arg3: memref<1x128xf32, #tpu.memory_space<vmem>>, %arg4: memref<128x128xf32, #tpu.memory_space<vmem>>, %arg5: memref<1x128xf32, #tpu.memory_space<vmem>>, %arg6: memref<128x128xf32, #tpu.memory_space<vmem>>, %arg7: memref<1x128xf32, #tpu.memory_space<vmem>>, %arg8: memref<256x256xf32, #tpu.memory_space<vmem>>) attributes {dimension_semantics = [#tpu.dimension_semantics<parallel>], iteration_bounds = array<i64: 1>, scalar_prefetch = 0 : i64, scratch_operands = 0 : i64, tpu.core_type = #tpu.core_type<tc>, window_params = [{transform_indices = @transform_0, window_bounds = array<i64: 256, 24>}, {pipeline_mode = #tpu.pipeline_mode<synchronous>, transform_indices = @transform_1, window_bounds = array<i64: 24, 128>}, {pipeline_mode = #tpu.pipeline_mode<synchronous>, transform_indices = @transform_2, window_bounds = array<i64: 1, 128>}, {pipeline_mode = #tpu.pipeline_mode<synchronous>, transform_indices = @transform_3, window_bounds = array<i64: 128, 128>}, {pipeline_mode = #tpu.pipeline_mode<synchronous>, transform_indices = @transform_4, window_bounds = array<i64: 1, 128>}, {pipeline_mode = #tpu.pipeline_mode<synchronous>, transform_indices = @transform_5, window_bounds = array<i64: 128, 128>}, {pipeline_mode = #tpu.pipeline_mode<synchronous>, transform_indices = @transform_6, window_bounds = array<i64: 1, 128>}, {transform_indices = @transform_7, window_bounds = array<i64: 256, 256>}]} {
    %c0 = arith.constant 0 : index
    %c0_0 = arith.constant 0 : index
    %0 = vector.load %arg1[%c0, %c0_0] : memref<256x24xf32, #tpu.memory_space<vmem>>, vector<256x24xf32>
    %c0_1 = arith.constant 0 : index
    %c0_2 = arith.constant 0 : index
    %1 = vector.load %arg2[%c0_1, %c0_2] : memref<24x128xf32, #tpu.memory_space<vmem>>, vector<24x128xf32>
    %cst = arith.constant dense<0.000000e+00> : vector<256x128xf32>
    %2 = tpu.matmul %0, %1, %cst {dimension_numbers = #tpu.dot_dimension_numbers<[1], [0], [0], [1], [0, 0, 1, 1], [], []>} : vector<256x24xf32>, vector<24x128xf32>, vector<256x128xf32> -> vector<256x128xf32>
    %c0_3 = arith.constant 0 : index
    %c0_4 = arith.constant 0 : index
    %3 = vector.load %arg3[%c0_3, %c0_4] : memref<1x128xf32, #tpu.memory_space<vmem>>, vector<1x128xf32>
    %4 = vector.broadcast %3 : vector<1x128xf32> to vector<256x128xf32>
    %5 = arith.addf %2, %4 : vector<256x128xf32>
    %cst_5 = arith.constant 0.000000e+00 : f32
    %6 = vector.broadcast %cst_5 : f32 to vector<256x128xf32>
    %7 = arith.maximumf %5, %6 : vector<256x128xf32>
    %c0_6 = arith.constant 0 : index
    %c0_7 = arith.constant 0 : index
    %8 = vector.load %arg4[%c0_6, %c0_7] : memref<128x128xf32, #tpu.memory_space<vmem>>, vector<128x128xf32>
    %cst_8 = arith.constant dense<0.000000e+00> : vector<256x128xf32>
    %9 = tpu.matmul %7, %8, %cst_8 {dimension_numbers = #tpu.dot_dimension_numbers<[1], [0], [0], [1], [0, 0, 1, 1], [], []>} : vector<256x128xf32>, vector<128x128xf32>, vector<256x128xf32> -> vector<256x128xf32>
    %c0_9 = arith.constant 0 : index
    %c0_10 = arith.constant 0 : index
    %10 = vector.load %arg5[%c0_9, %c0_10] : memref<1x128xf32, #tpu.memory_space<vmem>>, vector<1x128xf32>
    %11 = vector.broadcast %10 : vector<1x128xf32> to vector<256x128xf32>
    %12 = arith.addf %9, %11 : vector<256x128xf32>
    %cst_11 = arith.constant 0.000000e+00 : f32
    %13 = vector.broadcast %cst_11 : f32 to vector<256x128xf32>
    %14 = arith.maximumf %12, %13 : vector<256x128xf32>
    %c0_12 = arith.constant 0 : index
    %c0_13 = arith.constant 0 : index
    %15 = vector.load %arg6[%c0_12, %c0_13] : memref<128x128xf32, #tpu.memory_space<vmem>>, vector<128x128xf32>
    %cst_14 = arith.constant dense<0.000000e+00> : vector<256x128xf32>
    %16 = tpu.matmul %14, %15, %cst_14 {dimension_numbers = #tpu.dot_dimension_numbers<[1], [0], [0], [1], [0, 0, 1, 1], [], []>} : vector<256x128xf32>, vector<128x128xf32>, vector<256x128xf32> -> vector<256x128xf32>
    %c0_15 = arith.constant 0 : index
    %c0_16 = arith.constant 0 : index
    %17 = vector.load %arg7[%c0_15, %c0_16] : memref<1x128xf32, #tpu.memory_space<vmem>>, vector<1x128xf32>
    %18 = vector.broadcast %17 : vector<1x128xf32> to vector<256x128xf32>
    %19 = arith.addf %16, %18 : vector<256x128xf32>
    %20 = tpu.iota {dimensions = array<i32: 1>} : vector<256x128xi32>
    %c4_i32 = arith.constant 4 : i32
    %21 = vector.broadcast %c4_i32 : i32 to vector<256x128xi32>
    %22 = arith.cmpi slt, %20, %21 : vector<256x128xi32>
    %cst_17 = arith.constant -1.000000e+30 : f32
    %23 = vector.broadcast %cst_17 : f32 to vector<256x128xf32>
    %24 = arith.select %22, %19, %23 : vector<256x128xi1>, vector<256x128xf32>
    %cst_18 = arith.constant dense<0xFF800000> : vector<256xf32>
    %25 = vector.multi_reduction <maximumf>, %24, %cst_18 [1] : vector<256x128xf32> to vector<256xf32>
    %26 = vector.shape_cast %25 : vector<256xf32> to vector<256x1xf32>
    %27 = vector.broadcast %26 : vector<256x1xf32> to vector<256x128xf32>
    %28 = arith.subf %24, %27 : vector<256x128xf32>
    %29 = math.exp %28 : vector<256x128xf32>
    %cst_19 = arith.constant dense<0.000000e+00> : vector<256xf32>
    %30 = vector.multi_reduction <add>, %29, %cst_19 [1] : vector<256x128xf32> to vector<256xf32>
    %31 = vector.shape_cast %30 : vector<256xf32> to vector<256x1xf32>
    %32 = tpu.reciprocal %31 {approx = true} : vector<256x1xf32> -> vector<256x1xf32>
    %33 = vector.broadcast %32 : vector<256x1xf32> to vector<256x128xf32>
    %34 = arith.mulf %29, %33 : vector<256x128xf32>
    %c0_20 = arith.constant 0 : index
    %c0_21 = arith.constant 0 : index
    %35 = vector.load %arg8[%c0_20, %c0_21] : memref<256x256xf32, #tpu.memory_space<vmem>>, vector<256x128xf32>
    tpu.vector_store %arg8[%c0_20, %c0_21], %19 {strides = array<i32>} : memref<256x256xf32, #tpu.memory_space<vmem>>, vector<256x128xf32>,
    %c0_22 = arith.constant 0 : index
    %c128 = arith.constant 128 : index
    %36 = vector.load %arg8[%c0_22, %c128] : memref<256x256xf32, #tpu.memory_space<vmem>>, vector<256x128xf32>
    tpu.vector_store %arg8[%c0_22, %c128], %34 {strides = array<i32>} : memref<256x256xf32, #tpu.memory_space<vmem>>, vector<256x128xf32>,
    return
  }
  func.func @transform_0(%arg0: i32) -> (i32, i32) {
    %c0_i32 = arith.constant 0 : i32
    %c0_i32_0 = arith.constant 0 : i32
    return %arg0, %c0_i32 : i32, i32
  }
  func.func @transform_1(%arg0: i32) -> (i32, i32) {
    %c0_i32 = arith.constant 0 : i32
    %c0_i32_0 = arith.constant 0 : i32
    %c0_i32_1 = arith.constant 0 : i32
    return %c0_i32, %c0_i32_0 : i32, i32
  }
  func.func @transform_2(%arg0: i32) -> (i32, i32) {
    %c0_i32 = arith.constant 0 : i32
    %c0_i32_0 = arith.constant 0 : i32
    %c0_i32_1 = arith.constant 0 : i32
    return %c0_i32, %c0_i32_0 : i32, i32
  }
  func.func @transform_3(%arg0: i32) -> (i32, i32) {
    %c0_i32 = arith.constant 0 : i32
    %c0_i32_0 = arith.constant 0 : i32
    %c0_i32_1 = arith.constant 0 : i32
    return %c0_i32, %c0_i32_0 : i32, i32
  }
  func.func @transform_4(%arg0: i32) -> (i32, i32) {
    %c0_i32 = arith.constant 0 : i32
    %c0_i32_0 = arith.constant 0 : i32
    %c0_i32_1 = arith.constant 0 : i32
    return %c0_i32, %c0_i32_0 : i32, i32
  }
  func.func @transform_5(%arg0: i32) -> (i32, i32) {
    %c0_i32 = arith.constant 0 : i32
    %c0_i32_0 = arith.constant 0 : i32
    %c0_i32_1 = arith.constant 0 : i32
    return %c0_i32, %c0_i32_0 : i32, i32
  }
  func.func @transform_6(%arg0: i32) -> (i32, i32) {
    %c0_i32 = arith.constant 0 : i32
    %c0_i32_0 = arith.constant 0 : i32
    %c0_i32_1 = arith.constant 0 : i32
    return %c0_i32, %c0_i32_0 : i32, i32
  }
  func.func @transform_7(%arg0: i32) -> (i32, i32) {
    %c0_i32 = arith.constant 0 : i32
    %c0_i32_0 = arith.constant 0 : i32
    return %arg0, %c0_i32 : i32, i32
  }
}

</mosaic_0001>

<llo_original>
// kernel: tpu_custom_call.1
$region0: #{tpu_custom_call.1}
  #allocation0 [shape = 'u32[]', space=smem, size = 0x4, offset = 0x4, fixed_abs, tag = 'smem constant byte address 0x4 - core index']
  #allocation1 [shape = 'u32[144,128]{1,0:T(1,128)}', space=vmem, size = 0x12000, scoped, tag = 'internal scratch']
  %s0 = inlined_call_operand.vmem [shape: f32[256,24], index: 0, kind: input, shape index: {}]
  %s1 = inlined_call_operand.vmem [shape: f32[24,128], index: 1, kind: input, shape index: {}]
  %s2 = inlined_call_operand.vmem [shape: f32[1,128], index: 2, kind: input, shape index: {}]
  %s3 = inlined_call_operand.vmem [shape: f32[128,128], index: 3, kind: input, shape index: {}]
  %s4 = inlined_call_operand.vmem [shape: f32[1,128], index: 4, kind: input, shape index: {}]
  %s5 = inlined_call_operand.vmem [shape: f32[128,128], index: 5, kind: input, shape index: {}]
  %s6 = inlined_call_operand.vmem [shape: f32[1,128], index: 6, kind: input, shape index: {}]
  %s7 = inlined_call_operand.hbm [shape: f32[256,256], index: 7, kind: output, shape index: {}]
  %s8 = sld [smem:[#allocation0]]
  $region38: #{tpu_custom_call.1} parent=0
    _
  %s10 = ssub.s32 1, %s8
  %s11 = scalar_select 0, %s10, %s8
  $region1: #{tpu_custom_call.1} parent=0
    #allocation2 [shape = 'u8[262144]{0}', space=vmem, size = 0x40000, scoped, tag = 'output window, operand 0, single buffered']
    #allocation3 [shape = 's32[1]{0}', space=sflag, size = 0x4, scoped, tag = 'scoped memory for tpu_custom_call.1']
    %12 = vsyncpa [#allocation3], 0
    // Predicated region
    $region2: #{tpu_custom_call.1} parent=1 // pred_check
      _
    $region3: #{tpu_custom_call.1} parent=1 // pred_check_branch
      %14 = sbr.rel (0) target = $region5
    $region4: #{tpu_custom_call.1} parent=1 // pred_region
      _
    $region5: #{tpu_custom_call.1} parent=1 // pred_fallthru
      _
    // Predicated region
    $region6: #{tpu_custom_call.1} parent=1 // pred_check
      _
    $region7: #{tpu_custom_call.1} parent=1 // pred_check_branch
      %16 = sbr.rel (0) target = $region9
    $region8: #{tpu_custom_call.1} parent=1 // pred_region
      _
    $region9: #{tpu_custom_call.1} parent=1 // pred_fallthru
      _
    // Predicated region
    $region10: #{tpu_custom_call.1} parent=1 // pred_check
      _
    $region11: #{tpu_custom_call.1} parent=1 // pred_check_branch
      %18 = sbr.rel (0) target = $region13
    $region12: #{tpu_custom_call.1} parent=1 // pred_region
      _
    $region13: #{tpu_custom_call.1} parent=1 // pred_fallthru
      _
    // Predicated region
    $region14: #{tpu_custom_call.1} parent=1 // pred_check
      _
    $region15: #{tpu_custom_call.1} parent=1 // pred_check_branch
      %20 = sbr.rel (0) target = $region17
    $region16: #{tpu_custom_call.1} parent=1 // pred_region
      _
    $region17: #{tpu_custom_call.1} parent=1 // pred_fallthru
      _
    // Predicated region
    $region18: #{tpu_custom_call.1} parent=1 // pred_check
      _
    $region19: #{tpu_custom_call.1} parent=1 // pred_check_branch
      %22 = sbr.rel (0) target = $region21
    $region20: #{tpu_custom_call.1} parent=1 // pred_region
      _
    $region21: #{tpu_custom_call.1} parent=1 // pred_fallthru
      _
    // Predicated region
    $region22: #{tpu_custom_call.1} parent=1 // pred_check
      _
    $region23: #{tpu_custom_call.1} parent=1 // pred_check_branch
      %24 = sbr.rel (0) target = $region25
    $region24: #{tpu_custom_call.1} parent=1 // pred_region
      _
    $region25: #{tpu_custom_call.1} parent=1 // pred_fallthru
      _
    // Predicated region
    $region26: #{tpu_custom_call.1} parent=1 // pred_check
      _
    $region27: #{tpu_custom_call.1} parent=1 // pred_check_branch
      %26 = sbr.rel (0) target = $region29
    $region28: #{tpu_custom_call.1} parent=1 // pred_region
      _
    $region29: #{tpu_custom_call.1} parent=1 // pred_fallthru
      _
    %v27 = vld [vmem:[%s0] sm:$0xff]
    %v28 = vld [vmem:[%s0 + $0x8] sm:$0xff]
    %v29 = vld [vmem:[%s0 + $0x10] sm:$0xff]
    %v30 = vld [vmem:[%s0 + $0x18] sm:$0xff]
    %v31 = vld [vmem:[%s0 + $0x20] sm:$0xff]
    %v32 = vld [vmem:[%s0 + $0x28] sm:$0xff]
    %v33 = vld [vmem:[%s0 + $0x30] sm:$0xff]
    %v34 = vld [vmem:[%s0 + $0x38] sm:$0xff]
    %v35 = vld [vmem:[%s0 + $0x40] sm:$0xff]
    %v36 = vld [vmem:[%s0 + $0x48] sm:$0xff]
    %v37 = vld [vmem:[%s0 + $0x50] sm:$0xff]
    %v38 = vld [vmem:[%s0 + $0x58] sm:$0xff]
    %v39 = vld [vmem:[%s0 + $0x60] sm:$0xff]
    %v40 = vld [vmem:[%s0 + $0x68] sm:$0xff]
    %v41 = vld [vmem:[%s0 + $0x70] sm:$0xff]
    %v42 = vld [vmem:[%s0 + $0x78] sm:$0xff]
    %v43 = vld [vmem:[%s0 + $0x80] sm:$0xff]
    %v44 = vld [vmem:[%s0 + $0x88] sm:$0xff]
    %v45 = vld [vmem:[%s0 + $0x90] sm:$0xff]
    %v46 = vld [vmem:[%s0 + $0x98] sm:$0xff]
    %v47 = vld [vmem:[%s0 + $0xa0] sm:$0xff]
    %v48 = vld [vmem:[%s0 + $0xa8] sm:$0xff]
    %v49 = vld [vmem:[%s0 + $0xb0] sm:$0xff]
    %v50 = vld [vmem:[%s0 + $0xb8] sm:$0xff]
    %v51 = vld [vmem:[%s0 + $0xc0] sm:$0xff]
    %v52 = vld [vmem:[%s0 + $0xc8] sm:$0xff]
    %v53 = vld [vmem:[%s0 + $0xd0] sm:$0xff]
    %v54 = vld [vmem:[%s0 + $0xd8] sm:$0xff]
    %v55 = vld [vmem:[%s0 + $0xe0] sm:$0xff]
    %v56 = vld [vmem:[%s0 + $0xe8] sm:$0xff]
    %v57 = vld [vmem:[%s0 + $0xf0] sm:$0xff]
    %v58 = vld [vmem:[%s0 + $0xf8] sm:$0xff]
    %v59 = vld [vmem:[%s1] sm:$0xff]
    %v60 = vld [vmem:[%s1 + $0x8] sm:$0xff]
    %v61 = vld [vmem:[%s1 + $0x10] sm:$0xff]
    %v62 = vld [vmem:[%s2] sm:$0x1]
    %v64 = vlaneseq
    %v65 = vshrl.u32 %v64, 7
    %v66 = vsub.s32 0, %v65
    %v67 = vrot.slane %v62, %v66
    %vm69 = vcmask 195584
    %v71 = vsel %vm69, %v27, 0
    %v74 = vsel %vm69, %v28, 0
    %v77 = vsel %vm69, %v29, 0
    %v80 = vsel %vm69, %v30, 0
    %v83 = vsel %vm69, %v31, 0
    %v86 = vsel %vm69, %v32, 0
    %v89 = vsel %vm69, %v33, 0
    %v92 = vsel %vm69, %v34, 0
    %v95 = vsel %vm69, %v35, 0
    %v98 = vsel %vm69, %v36, 0
    %v101 = vsel %vm69, %v37, 0
    %v104 = vsel %vm69, %v38, 0
    %v107 = vsel %vm69, %v39, 0
    %v110 = vsel %vm69, %v40, 0
    %v113 = vsel %vm69, %v41, 0
    %v116 = vsel %vm69, %v42, 0
    %v119 = vsel %vm69, %v43, 0
    %v122 = vsel %vm69, %v44, 0
    %v125 = vsel %vm69, %v45, 0
    %v128 = vsel %vm69, %v46, 0
    %v131 = vsel %vm69, %v47, 0
    %v134 = vsel %vm69, %v48, 0
    %v137 = vsel %vm69, %v49, 0
    %v140 = vsel %vm69, %v50, 0
    %v143 = vsel %vm69, %v51, 0
    %v146 = vsel %vm69, %v52, 0
    %v149 = vsel %vm69, %v53, 0
    %v152 = vsel %vm69, %v54, 0
    %v155 = vsel %vm69, %v55, 0
    %v158 = vsel %vm69, %v56, 0
    %v161 = vsel %vm69, %v57, 0
    %v164 = vsel %vm69, %v58, 0
    %166 = vmatprep.subr.mxu0 0.0
    %167 = vmatpush1.msra.mxu0 %v59
    %168 = vmatprep.subr.mxu0 0.0
    %169 = vmatpush1.msra.mxu0 %v60
    %170 = vmatprep.subr.mxu0 0.0
    %171 = vmatpush1.msra.mxu0 %v61
    %172 = vmatprep.subr.mxu0 0.0
    %173 = vmatpush1.msra.mxu0 0.0
    %174 = vmatprep.subr.mxu0 0.0
    %175 = vmatpush1.msra.mxu0 0.0
    %176 = vmatprep.subr.mxu0 0.0
    %177 = vmatpush1.msra.mxu0 0.0
    %178 = vmatprep.subr.mxu0 0.0
    %179 = vmatpush1.msra.mxu0 0.0
    %180 = vmatprep.subr.mxu0 0.0
    %181 = vmatpush1.msra.mxu0 0.0
    %182 = vmatprep.subr.mxu0 0.0
    %183 = vmatpush1.msra.mxu0 0.0
    %184 = vmatprep.subr.mxu0 0.0
    %185 = vmatpush1.msra.mxu0 0.0
    %186 = vmatprep.subr.mxu0 0.0
    %187 = vmatpush1.msra.mxu0 0.0
    %188 = vmatprep.subr.mxu0 0.0
    %189 = vmatpush1.msra.mxu0 0.0
    %190 = vmatprep.subr.mxu0 0.0
    %191 = vmatpush1.msra.mxu0 0.0
    %192 = vmatprep.subr.mxu0 0.0
    %193 = vmatpush1.msra.mxu0 0.0
    %194 = vmatprep.subr.mxu0 0.0
    %195 = vmatpush1.msra.mxu0 0.0
    %196 = vmatprep.subr.mxu0 0.0
    %197 = vmatpush1.msra.mxu0 0.0
    %198 = vmatprep.subr.mxu0 0.0
    %199 = vmatpush1.msra.mxu0 0.0
    %200 = vmatprep.subr.mxu0 0.0
    %201 = vmatpush1.msra.mxu0 0.0
    %202 = vmatprep.subr.mxu0 0.0
    %203 = vmatpush1.msra.mxu0 0.0
    %204 = vmatprep.subr.mxu0 0.0
    %205 = vmatpush1.msra.mxu0 0.0
    %206 = vmatprep.subr.mxu0 0.0
    %207 = vmatpush1.msra.mxu0 0.0
    %208 = vmatprep.subr.mxu0 0.0
    %209 = vmatpush1.msra.mxu0 0.0
    %210 = vmatprep.subr.mxu0 0.0
    %211 = vmatpush1.msra.mxu0 0.0
    %212 = vmatprep.subr.mxu0 0.0
    %213 = vmatpush1.msra.mxu0 0.0
    %214 = vmatprep.subr.mxu0 0.0
    %215 = vmatpush1.msra.mxu0 0.0
    %216 = vmatprep.subr.mxu0 0.0
    %217 = vmatpush1.msra.mxu0 0.0
    %218 = vmatprep.subr.mxu0 0.0
    %219 = vmatpush1.msra.mxu0 0.0
    %220 = vmatprep.subr.mxu0 0.0
    %221 = vmatpush1.msra.mxu0 0.0
    %222 = vmatprep.subr.mxu0 0.0
    %223 = vmatpush1.msra.mxu0 0.0
    %224 = vmatprep.subr.mxu0 0.0
    %225 = vmatpush1.msra.mxu0 0.0
    %226 = vmatprep.subr.mxu0 0.0
    %227 = vmatpush1.msra.mxu0 0.0
    %228 = vmatprep.subr.mxu0 0.0
    %229 = vmatpush1.msra.mxu0 0.0
    %230 = vmatprep.mubr.f32.mxu0 0.0
    %231 = vmatmul.mubr.f32.gmra.mrb[0].mxu0 %v71
    %v232 = vpop.f32.mrb[0].mxu0
    %v233 = vadd.f32 %v67, %v232
    %v234 = vpop.f32.mrb[0].mxu0
    %235 = vmatprep.mubr.f32.mxu0 0.0
    %236 = vmatmul.mubr.f32.gmra.mrb[0].mxu0 %v74
    %v237 = vpop.f32.mrb[0].mxu0
    %v238 = vadd.f32 %v67, %v237
    %v239 = vpop.f32.mrb[0].mxu0
    %240 = vmatprep.mubr.f32.mxu0 0.0
    %241 = vmatmul.mubr.f32.gmra.mrb[0].mxu0 %v77
    %v242 = vpop.f32.mrb[0].mxu0
    %v243 = vadd.f32 %v67, %v242
    %v244 = vpop.f32.mrb[0].mxu0
    %245 = vmatprep.mubr.f32.mxu0 0.0
    %246 = vmatmul.mubr.f32.gmra.mrb[0].mxu0 %v80
    %v247 = vpop.f32.mrb[0].mxu0
    %v248 = vadd.f32 %v67, %v247
    %v249 = vpop.f32.mrb[0].mxu0
    %250 = vmatprep.mubr.f32.mxu0 0.0
    %251 = vmatmul.mubr.f32.gmra.mrb[0].mxu0 %v83
    %v252 = vpop.f32.mrb[0].mxu0
    %v253 = vadd.f32 %v67, %v252
    %v254 = vpop.f32.mrb[0].mxu0
    %255 = vmatprep.mubr.f32.mxu0 0.0
    %256 = vmatmul.mubr.f32.gmra.mrb[0].mxu0 %v86
    %v257 = vpop.f32.mrb[0].mxu0
    %v258 = vadd.f32 %v67, %v257
    %v259 = vpop.f32.mrb[0].mxu0
    %260 = vmatprep.mubr.f32.mxu0 0.0
    %261 = vmatmul.mubr.f32.gmra.mrb[0].mxu0 %v89
    %v262 = vpop.f32.mrb[0].mxu0
    %v263 = vadd.f32 %v67, %v262
    %v264 = vpop.f32.mrb[0].mxu0
    %265 = vmatprep.mubr.f32.mxu0 0.0
    %266 = vmatmul.mubr.f32.gmra.mrb[0].mxu0 %v92
    %v267 = vpop.f32.mrb[0].mxu0
    %v268 = vadd.f32 %v67, %v267
    %v269 = vpop.f32.mrb[0].mxu0
    %270 = vmatprep.mubr.f32.mxu0 0.0
    %271 = vmatmul.mubr.f32.gmra.mrb[0].mxu0 %v95
    %v272 = vpop.f32.mrb[0].mxu0
    %v273 = vadd.f32 %v67, %v272
    %v274 = vpop.f32.mrb[0].mxu0
    %275 = vmatprep.mubr.f32.mxu0 0.0
    %276 = vmatmul.mubr.f32.gmra.mrb[0].mxu0 %v98
    %v277 = vpop.f32.mrb[0].mxu0
    %v278 = vadd.f32 %v67, %v277
    %v279 = vpop.f32.mrb[0].mxu0
    %280 = vmatprep.mubr.f32.mxu0 0.0
    %281 = vmatmul.mubr.f32.gmra.mrb[0].mxu0 %v101
    %v282 = vpop.f32.mrb[0].mxu0
    %v283 = vadd.f32 %v67, %v282
    %v284 = vpop.f32.mrb[0].mxu0
    %285 = vmatprep.mubr.f32.mxu0 0.0
    %286 = vmatmul.mubr.f32.gmra.mrb[0].mxu0 %v104
    %v287 = vpop.f32.mrb[0].mxu0
    %v288 = vadd.f32 %v67, %v287
    %v289 = vpop.f32.mrb[0].mxu0
    %290 = vmatprep.mubr.f32.mxu0 0.0
    %291 = vmatmul.mubr.f32.gmra.mrb[0].mxu0 %v107
    %v292 = vpop.f32.mrb[0].mxu0
    %v293 = vadd.f32 %v67, %v292
    %v294 = vpop.f32.mrb[0].mxu0
    %295 = vmatprep.mubr.f32.mxu0 0.0
    %296 = vmatmul.mubr.f32.gmra.mrb[0].mxu0 %v110
    %v297 = vpop.f32.mrb[0].mxu0
    %v298 = vadd.f32 %v67, %v297
    %v299 = vpop.f32.mrb[0].mxu0
    %300 = vmatprep.mubr.f32.mxu0 0.0
    %301 = vmatmul.mubr.f32.gmra.mrb[0].mxu0 %v113
    %v302 = vpop.f32.mrb[0].mxu0
    %v303 = vadd.f32 %v67, %v302
    %v304 = vpop.f32.mrb[0].mxu0
    %305 = vmatprep.mubr.f32.mxu0 0.0
    %306 = vmatmul.mubr.f32.gmra.mrb[0].mxu0 %v116
    %v307 = vpop.f32.mrb[0].mxu0
    %v308 = vadd.f32 %v67, %v307
    %v309 = vpop.f32.mrb[0].mxu0
    %310 = vmatprep.mubr.f32.mxu0 0.0
    %311 = vmatmul.mubr.f32.gmra.mrb[0].mxu0 %v119
    %v312 = vpop.f32.mrb[0].mxu0
    %v313 = vadd.f32 %v67, %v312
    %v314 = vpop.f32.mrb[0].mxu0
    %315 = vmatprep.mubr.f32.mxu0 0.0
    %316 = vmatmul.mubr.f32.gmra.mrb[0].mxu0 %v122
    %v317 = vpop.f32.mrb[0].mxu0
    %v318 = vadd.f32 %v67, %v317
    %v319 = vpop.f32.mrb[0].mxu0
    %320 = vmatprep.mubr.f32.mxu0 0.0
    %321 = vmatmul.mubr.f32.gmra.mrb[0].mxu0 %v125
    %v322 = vpop.f32.mrb[0].mxu0
    %v323 = vadd.f32 %v67, %v322
    %v324 = vpop.f32.mrb[0].mxu0
    %325 = vmatprep.mubr.f32.mxu0 0.0
    %326 = vmatmul.mubr.f32.gmra.mrb[0].mxu0 %v128
    %v327 = vpop.f32.mrb[0].mxu0
    %v328 = vadd.f32 %v67, %v327
    %v329 = vpop.f32.mrb[0].mxu0
    %330 = vmatprep.mubr.f32.mxu0 0.0
    %331 = vmatmul.mubr.f32.gmra.mrb[0].mxu0 %v131
    %v332 = vpop.f32.mrb[0].mxu0
    %v333 = vadd.f32 %v67, %v332
    %v334 = vpop.f32.mrb[0].mxu0
    %335 = vmatprep.mubr.f32.mxu0 0.0
    %336 = vmatmul.mubr.f32.gmra.mrb[0].mxu0 %v134
    %v337 = vpop.f32.mrb[0].mxu0
    %v338 = vadd.f32 %v67, %v337
    %v339 = vpop.f32.mrb[0].mxu0
    %340 = vmatprep.mubr.f32.mxu0 0.0
    %341 = vmatmul.mubr.f32.gmra.mrb[0].mxu0 %v137
    %v342 = vpop.f32.mrb[0].mxu0
    %v343 = vadd.f32 %v67, %v342
    %v344 = vpop.f32.mrb[0].mxu0
    %345 = vmatprep.mubr.f32.mxu0 0.0
    %346 = vmatmul.mubr.f32.gmra.mrb[0].mxu0 %v140
    %v347 = vpop.f32.mrb[0].mxu0
    %v348 = vadd.f32 %v67, %v347
    %v349 = vpop.f32.mrb[0].mxu0
    %350 = vmatprep.mubr.f32.mxu0 0.0
    %351 = vmatmul.mubr.f32.gmra.mrb[0].mxu0 %v143
    %v352 = vpop.f32.mrb[0].mxu0
    %v353 = vadd.f32 %v67, %v352
    %v354 = vpop.f32.mrb[0].mxu0
    %355 = vmatprep.mubr.f32.mxu0 0.0
    %356 = vmatmul.mubr.f32.gmra.mrb[0].mxu0 %v146
    %v357 = vpop.f32.mrb[0].mxu0
    %v358 = vadd.f32 %v67, %v357
    %v359 = vpop.f32.mrb[0].mxu0
    %360 = vmatprep.mubr.f32.mxu0 0.0
    %361 = vmatmul.mubr.f32.gmra.mrb[0].mxu0 %v149
    %v362 = vpop.f32.mrb[0].mxu0
    %v363 = vadd.f32 %v67, %v362
    %v364 = vpop.f32.mrb[0].mxu0
    %365 = vmatprep.mubr.f32.mxu0 0.0
    %366 = vmatmul.mubr.f32.gmra.mrb[0].mxu0 %v152
    %v367 = vpop.f32.mrb[0].mxu0
    %v368 = vadd.f32 %v67, %v367
    %v369 = vpop.f32.mrb[0].mxu0
    %370 = vmatprep.mubr.f32.mxu0 0.0
    %371 = vmatmul.mubr.f32.gmra.mrb[0].mxu0 %v155
    %v372 = vpop.f32.mrb[0].mxu0
    %v373 = vadd.f32 %v67, %v372
    %v374 = vpop.f32.mrb[0].mxu0
    %375 = vmatprep.mubr.f32.mxu0 0.0
    %376 = vmatmul.mubr.f32.gmra.mrb[0].mxu0 %v158
    %v377 = vpop.f32.mrb[0].mxu0
    %v378 = vadd.f32 %v67, %v377
    %v379 = vpop.f32.mrb[0].mxu0
    %380 = vmatprep.mubr.f32.mxu0 0.0
    %381 = vmatmul.mubr.f32.gmra.mrb[0].mxu0 %v161
    %v382 = vpop.f32.mrb[0].mxu0
    %v383 = vadd.f32 %v67, %v382
    %v384 = vpop.f32.mrb[0].mxu0
    %385 = vmatprep.mubr.f32.mxu0 0.0
    %386 = vmatmul.mubr.f32.gmra.mrb[0].mxu0 %v164
    %v387 = vpop.f32.mrb[0].mxu0
    %v388 = vadd.f32 %v67, %v387
    %v389 = vpop.f32.mrb[0].mxu0
    %390 = vdwg.mxu0
    %v391 = vmax.f32 %v233, 0.0
    %v392 = vmax.f32 %v238, 0.0
    %v393 = vmax.f32 %v243, 0.0
    %v394 = vmax.f32 %v248, 0.0
    %v395 = vmax.f32 %v253, 0.0
    %v396 = vmax.f32 %v258, 0.0
    %v397 = vmax.f32 %v263, 0.0
    %v398 = vmax.f32 %v268, 0.0
    %v399 = vmax.f32 %v273, 0.0
    %v400 = vmax.f32 %v278, 0.0
    %v401 = vmax.f32 %v283, 0.0
    %v402 = vmax.f32 %v288, 0.0
    %v403 = vmax.f32 %v293, 0.0
    %v404 = vmax.f32 %v298, 0.0
    %v405 = vmax.f32 %v303, 0.0
    %v406 = vmax.f32 %v308, 0.0
    %v407 = vmax.f32 %v313, 0.0
    %v408 = vmax.f32 %v318, 0.0
    %v409 = vmax.f32 %v323, 0.0
    %v410 = vmax.f32 %v328, 0.0
    %v411 = vmax.f32 %v333, 0.0
    %v412 = vmax.f32 %v338, 0.0
    %v413 = vmax.f32 %v343, 0.0
    %v414 = vmax.f32 %v348, 0.0
    %v415 = vmax.f32 %v353, 0.0
    %v416 = vmax.f32 %v358, 0.0
    %v417 = vmax.f32 %v363, 0.0
    %v418 = vmax.f32 %v368, 0.0
    %v419 = vmax.f32 %v373, 0.0
    %v420 = vmax.f32 %v378, 0.0
    %v421 = vmax.f32 %v383, 0.0
    %v422 = vmax.f32 %v388, 0.0
    %v423 = vld [vmem:[%s3] sm:$0xff]
    %v424 = vld [vmem:[%s3 + $0x8] sm:$0xff]
    %v425 = vld [vmem:[%s3 + $0x10] sm:$0xff]
    %v426 = vld [vmem:[%s3 + $0x18] sm:$0xff]
    %v427 = vld [vmem:[%s3 + $0x20] sm:$0xff]
    %v428 = vld [vmem:[%s3 + $0x28] sm:$0xff]
    %v429 = vld [vmem:[%s3 + $0x30] sm:$0xff]
    %v430 = vld [vmem:[%s3 + $0x38] sm:$0xff]
    %v431 = vld [vmem:[%s3 + $0x40] sm:$0xff]
    %v432 = vld [vmem:[%s3 + $0x48] sm:$0xff]
    %v433 = vld [vmem:[%s3 + $0x50] sm:$0xff]
    %v434 = vld [vmem:[%s3 + $0x58] sm:$0xff]
    %v435 = vld [vmem:[%s3 + $0x60] sm:$0xff]
    %v436 = vld [vmem:[%s3 + $0x68] sm:$0xff]
    %v437 = vld [vmem:[%s3 + $0x70] sm:$0xff]
    %v438 = vld [vmem:[%s3 + $0x78] sm:$0xff]
    %v439 = vld [vmem:[%s4] sm:$0x1]
    %v441 = vlaneseq
    %v442 = vshrl.u32 %v441, 7
    %v443 = vsub.s32 0, %v442
    %v444 = vrot.slane %v439, %v443
    %446 = vmatprep.subr.mxu0 0.0
    %447 = vmatpush1.msra.mxu0 %v423
    %448 = vmatprep.subr.mxu0 0.0
    %449 = vmatpush1.msra.mxu0 %v424
    %450 = vmatprep.subr.mxu0 0.0
    %451 = vmatpush1.msra.mxu0 %v425
    %452 = vmatprep.subr.mxu0 0.0
    %453 = vmatpush1.msra.mxu0 %v426
    %454 = vmatprep.subr.mxu0 0.0
    %455 = vmatpush1.msra.mxu0 %v427
    %456 = vmatprep.subr.mxu0 0.0
    %457 = vmatpush1.msra.mxu0 %v428
    %458 = vmatprep.subr.mxu0 0.0
    %459 = vmatpush1.msra.mxu0 %v429
    %460 = vmatprep.subr.mxu0 0.0
    %461 = vmatpush1.msra.mxu0 %v430
    %462 = vmatprep.subr.mxu0 0.0
    %463 = vmatpush1.msra.mxu0 %v431
    %464 = vmatprep.subr.mxu0 0.0
    %465 = vmatpush1.msra.mxu0 %v432
    %466 = vmatprep.subr.mxu0 0.0
    %467 = vmatpush1.msra.mxu0 %v433
    %468 = vmatprep.subr.mxu0 0.0
    %469 = vmatpush1.msra.mxu0 %v434
    %470 = vmatprep.subr.mxu0 0.0
    %471 = vmatpush1.msra.mxu0 %v435
    %472 = vmatprep.subr.mxu0 0.0
    %473 = vmatpush1.msra.mxu0 %v436
    %474 = vmatprep.subr.mxu0 0.0
    %475 = vmatpush1.msra.mxu0 %v437
    %476 = vmatprep.subr.mxu0 0.0
    %477 = vmatpush1.msra.mxu0 %v438
    %478 = vmatprep.subr.mxu0 0.0
    %479 = vmatpush1.msra.mxu0 0.0
    %480 = vmatprep.subr.mxu0 0.0
    %481 = vmatpush1.msra.mxu0 0.0
    %482 = vmatprep.subr.mxu0 0.0
    %483 = vmatpush1.msra.mxu0 0.0
    %484 = vmatprep.subr.mxu0 0.0
    %485 = vmatpush1.msra.mxu0 0.0
    %486 = vmatprep.subr.mxu0 0.0
    %487 = vmatpush1.msra.mxu0 0.0
    %488 = vmatprep.subr.mxu0 0.0
    %489 = vmatpush1.msra.mxu0 0.0
    %490 = vmatprep.subr.mxu0 0.0
    %491 = vmatpush1.msra.mxu0 0.0
    %492 = vmatprep.subr.mxu0 0.0
    %493 = vmatpush1.msra.mxu0 0.0
    %494 = vmatprep.subr.mxu0 0.0
    %495 = vmatpush1.msra.mxu0 0.0
    %496 = vmatprep.subr.mxu0 0.0
    %497 = vmatpush1.msra.mxu0 0.0
    %498 = vmatprep.subr.mxu0 0.0
    %499 = vmatpush1.msra.mxu0 0.0
    %500 = vmatprep.subr.mxu0 0.0
    %501 = vmatpush1.msra.mxu0 0.0
    %502 = vmatprep.subr.mxu0 0.0
    %503 = vmatpush1.msra.mxu0 0.0
    %504 = vmatprep.subr.mxu0 0.0
    %505 = vmatpush1.msra.mxu0 0.0
    %506 = vmatprep.subr.mxu0 0.0
    %507 = vmatpush1.msra.mxu0 0.0
    %508 = vmatprep.subr.mxu0 0.0
    %509 = vmatpush1.msra.mxu0 0.0
    %510 = vmatprep.mubr.f32.mxu0 0.0
    %511 = vmatmul.mubr.f32.gmra.mrb[0].mxu0 %v391
    %v512 = vpop.f32.mrb[0].mxu0
    %v513 = vadd.f32 %v444, %v512
    %v514 = vpop.f32.mrb[0].mxu0
    %515 = vmatprep.mubr.f32.mxu0 0.0
    %516 = vmatmul.mubr.f32.gmra.mrb[0].mxu0 %v392
    %v517 = vpop.f32.mrb[0].mxu0
    %v518 = vadd.f32 %v444, %v517
    %v519 = vpop.f32.mrb[0].mxu0
    %520 = vmatprep.mubr.f32.mxu0 0.0
    %521 = vmatmul.mubr.f32.gmra.mrb[0].mxu0 %v393
    %v522 = vpop.f32.mrb[0].mxu0
    %v523 = vadd.f32 %v444, %v522
    %v524 = vpop.f32.mrb[0].mxu0
    %525 = vmatprep.mubr.f32.mxu0 0.0
    %526 = vmatmul.mubr.f32.gmra.mrb[0].mxu0 %v394
    %v527 = vpop.f32.mrb[0].mxu0
    %v528 = vadd.f32 %v444, %v527
    %v529 = vpop.f32.mrb[0].mxu0
    %530 = vmatprep.mubr.f32.mxu0 0.0
    %531 = vmatmul.mubr.f32.gmra.mrb[0].mxu0 %v395
    %v532 = vpop.f32.mrb[0].mxu0
    %v533 = vadd.f32 %v444, %v532
    %v534 = vpop.f32.mrb[0].mxu0
    %535 = vmatprep.mubr.f32.mxu0 0.0
    %536 = vmatmul.mubr.f32.gmra.mrb[0].mxu0 %v396
    %v537 = vpop.f32.mrb[0].mxu0
    %v538 = vadd.f32 %v444, %v537
    %v539 = vpop.f32.mrb[0].mxu0
    %540 = vmatprep.mubr.f32.mxu0 0.0
    %541 = vmatmul.mubr.f32.gmra.mrb[0].mxu0 %v397
    %v542 = vpop.f32.mrb[0].mxu0
    %v543 = vadd.f32 %v444, %v542
    %v544 = vpop.f32.mrb[0].mxu0
    %545 = vmatprep.mubr.f32.mxu0 0.0
    %546 = vmatmul.mubr.f32.gmra.mrb[0].mxu0 %v398
    %v547 = vpop.f32.mrb[0].mxu0
    %v548 = vadd.f32 %v444, %v547
    %v549 = vpop.f32.mrb[0].mxu0
    %550 = vmatprep.mubr.f32.mxu0 0.0
    %551 = vmatmul.mubr.f32.gmra.mrb[0].mxu0 %v399
    %v552 = vpop.f32.mrb[0].mxu0
    %v553 = vadd.f32 %v444, %v552
    %v554 = vpop.f32.mrb[0].mxu0
    %555 = vmatprep.mubr.f32.mxu0 0.0
    %556 = vmatmul.mubr.f32.gmra.mrb[0].mxu0 %v400
    %v557 = vpop.f32.mrb[0].mxu0
    %v558 = vadd.f32 %v444, %v557
    %v559 = vpop.f32.mrb[0].mxu0
    %560 = vmatprep.mubr.f32.mxu0 0.0
    %561 = vmatmul.mubr.f32.gmra.mrb[0].mxu0 %v401
    %v562 = vpop.f32.mrb[0].mxu0
    %v563 = vadd.f32 %v444, %v562
    %v564 = vpop.f32.mrb[0].mxu0
    %565 = vmatprep.mubr.f32.mxu0 0.0
    %566 = vmatmul.mubr.f32.gmra.mrb[0].mxu0 %v402
    %v567 = vpop.f32.mrb[0].mxu0
    %v568 = vadd.f32 %v444, %v567
    %v569 = vpop.f32.mrb[0].mxu0
    %570 = vmatprep.mubr.f32.mxu0 0.0
    %571 = vmatmul.mubr.f32.gmra.mrb[0].mxu0 %v403
    %v572 = vpop.f32.mrb[0].mxu0
    %v573 = vadd.f32 %v444, %v572
    %v574 = vpop.f32.mrb[0].mxu0
    %575 = vmatprep.mubr.f32.mxu0 0.0
    %576 = vmatmul.mubr.f32.gmra.mrb[0].mxu0 %v404
    %v577 = vpop.f32.mrb[0].mxu0
    %v578 = vadd.f32 %v444, %v577
    %v579 = vpop.f32.mrb[0].mxu0
    %580 = vmatprep.mubr.f32.mxu0 0.0
    %581 = vmatmul.mubr.f32.gmra.mrb[0].mxu0 %v405
    %v582 = vpop.f32.mrb[0].mxu0
    %v583 = vadd.f32 %v444, %v582
    %v584 = vpop.f32.mrb[0].mxu0
    %585 = vmatprep.mubr.f32.mxu0 0.0
    %586 = vmatmul.mubr.f32.gmra.mrb[0].mxu0 %v406
    %v587 = vpop.f32.mrb[0].mxu0
    %v588 = vadd.f32 %v444, %v587
    %v589 = vpop.f32.mrb[0].mxu0
    %590 = vmatprep.mubr.f32.mxu0 0.0
    %591 = vmatmul.mubr.f32.gmra.mrb[0].mxu0 %v407
    %v592 = vpop.f32.mrb[0].mxu0
    %v593 = vadd.f32 %v444, %v592
    %v594 = vpop.f32.mrb[0].mxu0
    %595 = vmatprep.mubr.f32.mxu0 0.0
    %596 = vmatmul.mubr.f32.gmra.mrb[0].mxu0 %v408
    %v597 = vpop.f32.mrb[0].mxu0
    %v598 = vadd.f32 %v444, %v597
    %v599 = vpop.f32.mrb[0].mxu0
    %600 = vmatprep.mubr.f32.mxu0 0.0
    %601 = vmatmul.mubr.f32.gmra.mrb[0].mxu0 %v409
    %v602 = vpop.f32.mrb[0].mxu0
    %v603 = vadd.f32 %v444, %v602
    %v604 = vpop.f32.mrb[0].mxu0
    %605 = vmatprep.mubr.f32.mxu0 0.0
    %606 = vmatmul.mubr.f32.gmra.mrb[0].mxu0 %v410
    %v607 = vpop.f32.mrb[0].mxu0
    %v608 = vadd.f32 %v444, %v607
    %v609 = vpop.f32.mrb[0].mxu0
    %610 = vmatprep.mubr.f32.mxu0 0.0
    %611 = vmatmul.mubr.f32.gmra.mrb[0].mxu0 %v411
    %v612 = vpop.f32.mrb[0].mxu0
    %v613 = vadd.f32 %v444, %v612
    %v614 = vpop.f32.mrb[0].mxu0
    %615 = vmatprep.mubr.f32.mxu0 0.0
    %616 = vmatmul.mubr.f32.gmra.mrb[0].mxu0 %v412
    %v617 = vpop.f32.mrb[0].mxu0
    %v618 = vadd.f32 %v444, %v617
    %v619 = vpop.f32.mrb[0].mxu0
    %620 = vmatprep.mubr.f32.mxu0 0.0
    %621 = vmatmul.mubr.f32.gmra.mrb[0].mxu0 %v413
    %v622 = vpop.f32.mrb[0].mxu0
    %v623 = vadd.f32 %v444, %v622
    %v624 = vpop.f32.mrb[0].mxu0
    %625 = vmatprep.mubr.f32.mxu0 0.0
    %626 = vmatmul.mubr.f32.gmra.mrb[0].mxu0 %v414
    %v627 = vpop.f32.mrb[0].mxu0
    %v628 = vadd.f32 %v444, %v627
    %v629 = vpop.f32.mrb[0].mxu0
    %630 = vmatprep.mubr.f32.mxu0 0.0
    %631 = vmatmul.mubr.f32.gmra.mrb[0].mxu0 %v415
    %v632 = vpop.f32.mrb[0].mxu0
    %v633 = vadd.f32 %v444, %v632
    %v634 = vpop.f32.mrb[0].mxu0
    %635 = vmatprep.mubr.f32.mxu0 0.0
    %636 = vmatmul.mubr.f32.gmra.mrb[0].mxu0 %v416
    %v637 = vpop.f32.mrb[0].mxu0
    %v638 = vadd.f32 %v444, %v637
    %v639 = vpop.f32.mrb[0].mxu0
    %640 = vmatprep.mubr.f32.mxu0 0.0
    %641 = vmatmul.mubr.f32.gmra.mrb[0].mxu0 %v417
    %v642 = vpop.f32.mrb[0].mxu0
    %v643 = vadd.f32 %v444, %v642
    %v644 = vpop.f32.mrb[0].mxu0
    %645 = vmatprep.mubr.f32.mxu0 0.0
    %646 = vmatmul.mubr.f32.gmra.mrb[0].mxu0 %v418
    %v647 = vpop.f32.mrb[0].mxu0
    %v648 = vadd.f32 %v444, %v647
    %v649 = vpop.f32.mrb[0].mxu0
    %650 = vmatprep.mubr.f32.mxu0 0.0
    %651 = vmatmul.mubr.f32.gmra.mrb[0].mxu0 %v419
    %v652 = vpop.f32.mrb[0].mxu0
    %v653 = vadd.f32 %v444, %v652
    %v654 = vpop.f32.mrb[0].mxu0
    %655 = vmatprep.mubr.f32.mxu0 0.0
    %656 = vmatmul.mubr.f32.gmra.mrb[0].mxu0 %v420
    %v657 = vpop.f32.mrb[0].mxu0
    %v658 = vadd.f32 %v444, %v657
    %v659 = vpop.f32.mrb[0].mxu0
    %660 = vmatprep.mubr.f32.mxu0 0.0
    %661 = vmatmul.mubr.f32.gmra.mrb[0].mxu0 %v421
    %v662 = vpop.f32.mrb[0].mxu0
    %v663 = vadd.f32 %v444, %v662
    %v664 = vpop.f32.mrb[0].mxu0
    %665 = vmatprep.mubr.f32.mxu0 0.0
    %666 = vmatmul.mubr.f32.gmra.mrb[0].mxu0 %v422
    %v667 = vpop.f32.mrb[0].mxu0
    %v668 = vadd.f32 %v444, %v667
    %v669 = vpop.f32.mrb[0].mxu0
    %670 = vdwg.mxu0
    %v671 = vmax.f32 %v513, 0.0
    %v672 = vmax.f32 %v518, 0.0
    %v673 = vmax.f32 %v523, 0.0
    %v674 = vmax.f32 %v528, 0.0
    %v675 = vmax.f32 %v533, 0.0
    %v676 = vmax.f32 %v538, 0.0
    %v677 = vmax.f32 %v543, 0.0
    %v678 = vmax.f32 %v548, 0.0
    %v679 = vmax.f32 %v553, 0.0
    %v680 = vmax.f32 %v558, 0.0
    %v681 = vmax.f32 %v563, 0.0
    %v682 = vmax.f32 %v568, 0.0
    %v683 = vmax.f32 %v573, 0.0
    %v684 = vmax.f32 %v578, 0.0
    %v685 = vmax.f32 %v583, 0.0
    %v686 = vmax.f32 %v588, 0.0
    %v687 = vmax.f32 %v593, 0.0
    %v688 = vmax.f32 %v598, 0.0
    %v689 = vmax.f32 %v603, 0.0
    %v690 = vmax.f32 %v608, 0.0
    %v691 = vmax.f32 %v613, 0.0
    %v692 = vmax.f32 %v618, 0.0
    %v693 = vmax.f32 %v623, 0.0
    %v694 = vmax.f32 %v628, 0.0
    %v695 = vmax.f32 %v633, 0.0
    %v696 = vmax.f32 %v638, 0.0
    %v697 = vmax.f32 %v643, 0.0
    %v698 = vmax.f32 %v648, 0.0
    %v699 = vmax.f32 %v653, 0.0
    %v700 = vmax.f32 %v658, 0.0
    %v701 = vmax.f32 %v663, 0.0
    %v702 = vmax.f32 %v668, 0.0
    %v703 = vld [vmem:[%s5] sm:$0xff]
    %v704 = vld [vmem:[%s5 + $0x8] sm:$0xff]
    %v705 = vld [vmem:[%s5 + $0x10] sm:$0xff]
    %v706 = vld [vmem:[%s5 + $0x18] sm:$0xff]
    %v707 = vld [vmem:[%s5 + $0x20] sm:$0xff]
    %v708 = vld [vmem:[%s5 + $0x28] sm:$0xff]
    %v709 = vld [vmem:[%s5 + $0x30] sm:$0xff]
    %v710 = vld [vmem:[%s5 + $0x38] sm:$0xff]
    %v711 = vld [vmem:[%s5 + $0x40] sm:$0xff]
    %v712 = vld [vmem:[%s5 + $0x48] sm:$0xff]
    %v713 = vld [vmem:[%s5 + $0x50] sm:$0xff]
    %v714 = vld [vmem:[%s5 + $0x58] sm:$0xff]
    %v715 = vld [vmem:[%s5 + $0x60] sm:$0xff]
    %v716 = vld [vmem:[%s5 + $0x68] sm:$0xff]
    %v717 = vld [vmem:[%s5 + $0x70] sm:$0xff]
    %v718 = vld [vmem:[%s5 + $0x78] sm:$0xff]
    %v719 = vld [vmem:[%s6] sm:$0x1]
    %v721 = vlaneseq
    %v722 = vshrl.u32 %v721, 7
    %v723 = vsub.s32 0, %v722
    %v724 = vrot.slane %v719, %v723
    %726 = vmatprep.subr.mxu0 0.0
    %727 = vmatpush1.msra.mxu0 %v703
    %728 = vmatprep.subr.mxu0 0.0
    %729 = vmatpush1.msra.mxu0 %v704
    %730 = vmatprep.subr.mxu0 0.0
    %731 = vmatpush1.msra.mxu0 %v705
    %732 = vmatprep.subr.mxu0 0.0
    %733 = vmatpush1.msra.mxu0 %v706
    %734 = vmatprep.subr.mxu0 0.0
    %735 = vmatpush1.msra.mxu0 %v707
    %736 = vmatprep.subr.mxu0 0.0
    %737 = vmatpush1.msra.mxu0 %v708
    %738 = vmatprep.subr.mxu0 0.0
    %739 = vmatpush1.msra.mxu0 %v709
    %740 = vmatprep.subr.mxu0 0.0
    %741 = vmatpush1.msra.mxu0 %v710
    %742 = vmatprep.subr.mxu0 0.0
    %743 = vmatpush1.msra.mxu0 %v711
    %744 = vmatprep.subr.mxu0 0.0
    %745 = vmatpush1.msra.mxu0 %v712
    %746 = vmatprep.subr.mxu0 0.0
    %747 = vmatpush1.msra.mxu0 %v713
    %748 = vmatprep.subr.mxu0 0.0
    %749 = vmatpush1.msra.mxu0 %v714
    %750 = vmatprep.subr.mxu0 0.0
    %751 = vmatpush1.msra.mxu0 %v715
    %752 = vmatprep.subr.mxu0 0.0
    %753 = vmatpush1.msra.mxu0 %v716
    %754 = vmatprep.subr.mxu0 0.0
    %755 = vmatpush1.msra.mxu0 %v717
    %756 = vmatprep.subr.mxu0 0.0
    %757 = vmatpush1.msra.mxu0 %v718
    %758 = vmatprep.subr.mxu0 0.0
    %759 = vmatpush1.msra.mxu0 0.0
    %760 = vmatprep.subr.mxu0 0.0
    %761 = vmatpush1.msra.mxu0 0.0
    %762 = vmatprep.subr.mxu0 0.0
    %763 = vmatpush1.msra.mxu0 0.0
    %764 = vmatprep.subr.mxu0 0.0
    %765 = vmatpush1.msra.mxu0 0.0
    %766 = vmatprep.subr.mxu0 0.0
    %767 = vmatpush1.msra.mxu0 0.0
    %768 = vmatprep.subr.mxu0 0.0
    %769 = vmatpush1.msra.mxu0 0.0
    %770 = vmatprep.subr.mxu0 0.0
    %771 = vmatpush1.msra.mxu0 0.0
    %772 = vmatprep.subr.mxu0 0.0
    %773 = vmatpush1.msra.mxu0 0.0
    %774 = vmatprep.subr.mxu0 0.0
    %775 = vmatpush1.msra.mxu0 0.0
    %776 = vmatprep.subr.mxu0 0.0
    %777 = vmatpush1.msra.mxu0 0.0
    %778 = vmatprep.subr.mxu0 0.0
    %779 = vmatpush1.msra.mxu0 0.0
    %780 = vmatprep.subr.mxu0 0.0
    %781 = vmatpush1.msra.mxu0 0.0
    %782 = vmatprep.subr.mxu0 0.0
    %783 = vmatpush1.msra.mxu0 0.0
    %784 = vmatprep.subr.mxu0 0.0
    %785 = vmatpush1.msra.mxu0 0.0
    %786 = vmatprep.subr.mxu0 0.0
    %787 = vmatpush1.msra.mxu0 0.0
    %788 = vmatprep.subr.mxu0 0.0
    %789 = vmatpush1.msra.mxu0 0.0
    %790 = vmatprep.mubr.f32.mxu0 0.0
    %791 = vmatmul.mubr.f32.gmra.mrb[0].mxu0 %v671
    %v792 = vpop.f32.mrb[0].mxu0
    %v793 = vadd.f32 %v724, %v792
    %v794 = vpop.f32.mrb[0].mxu0
    %795 = vmatprep.mubr.f32.mxu0 0.0
    %796 = vmatmul.mubr.f32.gmra.mrb[0].mxu0 %v672
    %v797 = vpop.f32.mrb[0].mxu0
    %v798 = vadd.f32 %v724, %v797
    %v799 = vpop.f32.mrb[0].mxu0
    %800 = vmatprep.mubr.f32.mxu0 0.0
    %801 = vmatmul.mubr.f32.gmra.mrb[0].mxu0 %v673
    %v802 = vpop.f32.mrb[0].mxu0
    %v803 = vadd.f32 %v724, %v802
    %v804 = vpop.f32.mrb[0].mxu0
    %805 = vmatprep.mubr.f32.mxu0 0.0
    %806 = vmatmul.mubr.f32.gmra.mrb[0].mxu0 %v674
    %v807 = vpop.f32.mrb[0].mxu0
    %v808 = vadd.f32 %v724, %v807
    %v809 = vpop.f32.mrb[0].mxu0
    %810 = vmatprep.mubr.f32.mxu0 0.0
    %811 = vmatmul.mubr.f32.gmra.mrb[0].mxu0 %v675
    %v812 = vpop.f32.mrb[0].mxu0
    %v813 = vadd.f32 %v724, %v812
    %v814 = vpop.f32.mrb[0].mxu0
    %815 = vmatprep.mubr.f32.mxu0 0.0
    %816 = vmatmul.mubr.f32.gmra.mrb[0].mxu0 %v676
    %v817 = vpop.f32.mrb[0].mxu0
    %v818 = vadd.f32 %v724, %v817
    %v819 = vpop.f32.mrb[0].mxu0
    %820 = vmatprep.mubr.f32.mxu0 0.0
    %821 = vmatmul.mubr.f32.gmra.mrb[0].mxu0 %v677
    %v822 = vpop.f32.mrb[0].mxu0
    %v823 = vadd.f32 %v724, %v822
    %v824 = vpop.f32.mrb[0].mxu0
    %825 = vmatprep.mubr.f32.mxu0 0.0
    %826 = vmatmul.mubr.f32.gmra.mrb[0].mxu0 %v678
    %v827 = vpop.f32.mrb[0].mxu0
    %v828 = vadd.f32 %v724, %v827
    %v829 = vpop.f32.mrb[0].mxu0
    %830 = vmatprep.mubr.f32.mxu0 0.0
    %831 = vmatmul.mubr.f32.gmra.mrb[0].mxu0 %v679
    %v832 = vpop.f32.mrb[0].mxu0
    %v833 = vadd.f32 %v724, %v832
    %v834 = vpop.f32.mrb[0].mxu0
    %835 = vmatprep.mubr.f32.mxu0 0.0
    %836 = vmatmul.mubr.f32.gmra.mrb[0].mxu0 %v680
    %v837 = vpop.f32.mrb[0].mxu0
    %v838 = vadd.f32 %v724, %v837
    %v839 = vpop.f32.mrb[0].mxu0
    %840 = vmatprep.mubr.f32.mxu0 0.0
    %841 = vmatmul.mubr.f32.gmra.mrb[0].mxu0 %v681
    %v842 = vpop.f32.mrb[0].mxu0
    %v843 = vadd.f32 %v724, %v842
    %v844 = vpop.f32.mrb[0].mxu0
    %845 = vmatprep.mubr.f32.mxu0 0.0
    %846 = vmatmul.mubr.f32.gmra.mrb[0].mxu0 %v682
    %v847 = vpop.f32.mrb[0].mxu0
    %v848 = vadd.f32 %v724, %v847
    %v849 = vpop.f32.mrb[0].mxu0
    %850 = vmatprep.mubr.f32.mxu0 0.0
    %851 = vmatmul.mubr.f32.gmra.mrb[0].mxu0 %v683
    %v852 = vpop.f32.mrb[0].mxu0
    %v853 = vadd.f32 %v724, %v852
    %v854 = vpop.f32.mrb[0].mxu0
    %855 = vmatprep.mubr.f32.mxu0 0.0
    %856 = vmatmul.mubr.f32.gmra.mrb[0].mxu0 %v684
    %v857 = vpop.f32.mrb[0].mxu0
    %v858 = vadd.f32 %v724, %v857
    %v859 = vpop.f32.mrb[0].mxu0
    %860 = vmatprep.mubr.f32.mxu0 0.0
    %861 = vmatmul.mubr.f32.gmra.mrb[0].mxu0 %v685
    %v862 = vpop.f32.mrb[0].mxu0
    %v863 = vadd.f32 %v724, %v862
    %v864 = vpop.f32.mrb[0].mxu0
    %865 = vmatprep.mubr.f32.mxu0 0.0
    %866 = vmatmul.mubr.f32.gmra.mrb[0].mxu0 %v686
    %v867 = vpop.f32.mrb[0].mxu0
    %v868 = vadd.f32 %v724, %v867
    %v869 = vpop.f32.mrb[0].mxu0
    %870 = vmatprep.mubr.f32.mxu0 0.0
    %871 = vmatmul.mubr.f32.gmra.mrb[0].mxu0 %v687
    %v872 = vpop.f32.mrb[0].mxu0
    %v873 = vadd.f32 %v724, %v872
    %v874 = vpop.f32.mrb[0].mxu0
    %875 = vmatprep.mubr.f32.mxu0 0.0
    %876 = vmatmul.mubr.f32.gmra.mrb[0].mxu0 %v688
    %v877 = vpop.f32.mrb[0].mxu0
    %v878 = vadd.f32 %v724, %v877
    %v879 = vpop.f32.mrb[0].mxu0
    %880 = vmatprep.mubr.f32.mxu0 0.0
    %881 = vmatmul.mubr.f32.gmra.mrb[0].mxu0 %v689
    %v882 = vpop.f32.mrb[0].mxu0
    %v883 = vadd.f32 %v724, %v882
    %v884 = vpop.f32.mrb[0].mxu0
    %885 = vmatprep.mubr.f32.mxu0 0.0
    %886 = vmatmul.mubr.f32.gmra.mrb[0].mxu0 %v690
    %v887 = vpop.f32.mrb[0].mxu0
    %v888 = vadd.f32 %v724, %v887
    %v889 = vpop.f32.mrb[0].mxu0
    %890 = vmatprep.mubr.f32.mxu0 0.0
    %891 = vmatmul.mubr.f32.gmra.mrb[0].mxu0 %v691
    %v892 = vpop.f32.mrb[0].mxu0
    %v893 = vadd.f32 %v724, %v892
    %v894 = vpop.f32.mrb[0].mxu0
    %895 = vmatprep.mubr.f32.mxu0 0.0
    %896 = vmatmul.mubr.f32.gmra.mrb[0].mxu0 %v692
    %v897 = vpop.f32.mrb[0].mxu0
    %v898 = vadd.f32 %v724, %v897
    %v899 = vpop.f32.mrb[0].mxu0
    %900 = vmatprep.mubr.f32.mxu0 0.0
    %901 = vmatmul.mubr.f32.gmra.mrb[0].mxu0 %v693
    %v902 = vpop.f32.mrb[0].mxu0
    %v903 = vadd.f32 %v724, %v902
    %v904 = vpop.f32.mrb[0].mxu0
    %905 = vmatprep.mubr.f32.mxu0 0.0
    %906 = vmatmul.mubr.f32.gmra.mrb[0].mxu0 %v694
    %v907 = vpop.f32.mrb[0].mxu0
    %v908 = vadd.f32 %v724, %v907
    %v909 = vpop.f32.mrb[0].mxu0
    %910 = vmatprep.mubr.f32.mxu0 0.0
    %911 = vmatmul.mubr.f32.gmra.mrb[0].mxu0 %v695
    %v912 = vpop.f32.mrb[0].mxu0
    %v913 = vadd.f32 %v724, %v912
    %v914 = vpop.f32.mrb[0].mxu0
    %915 = vmatprep.mubr.f32.mxu0 0.0
    %916 = vmatmul.mubr.f32.gmra.mrb[0].mxu0 %v696
    %v917 = vpop.f32.mrb[0].mxu0
    %v918 = vadd.f32 %v724, %v917
    %v919 = vpop.f32.mrb[0].mxu0
    %920 = vmatprep.mubr.f32.mxu0 0.0
    %921 = vmatmul.mubr.f32.gmra.mrb[0].mxu0 %v697
    %v922 = vpop.f32.mrb[0].mxu0
    %v923 = vadd.f32 %v724, %v922
    %v924 = vpop.f32.mrb[0].mxu0
    %925 = vmatprep.mubr.f32.mxu0 0.0
    %926 = vmatmul.mubr.f32.gmra.mrb[0].mxu0 %v698
    %v927 = vpop.f32.mrb[0].mxu0
    %v928 = vadd.f32 %v724, %v927
    %v929 = vpop.f32.mrb[0].mxu0
    %930 = vmatprep.mubr.f32.mxu0 0.0
    %931 = vmatmul.mubr.f32.gmra.mrb[0].mxu0 %v699
    %v932 = vpop.f32.mrb[0].mxu0
    %v933 = vadd.f32 %v724, %v932
    %v934 = vpop.f32.mrb[0].mxu0
    %935 = vmatprep.mubr.f32.mxu0 0.0
    %936 = vmatmul.mubr.f32.gmra.mrb[0].mxu0 %v700
    %v937 = vpop.f32.mrb[0].mxu0
    %v938 = vadd.f32 %v724, %v937
    %v939 = vpop.f32.mrb[0].mxu0
    %940 = vmatprep.mubr.f32.mxu0 0.0
    %941 = vmatmul.mubr.f32.gmra.mrb[0].mxu0 %v701
    %v942 = vpop.f32.mrb[0].mxu0
    %v943 = vadd.f32 %v724, %v942
    %v944 = vpop.f32.mrb[0].mxu0
    %945 = vmatprep.mubr.f32.mxu0 0.0
    %946 = vmatmul.mubr.f32.gmra.mrb[0].mxu0 %v702
    %v947 = vpop.f32.mrb[0].mxu0
    %v948 = vadd.f32 %v724, %v947
    %v949 = vpop.f32.mrb[0].mxu0
    %950 = vdwg.mxu0
    %v951 = vlaneseq
    %v952 = vand.u32 %v951, 127
    %vm953 = vcmp.lt.s32.totalorder %v952, 4
    %v954 = vsel %vm953, %v793, -1e+30
    %v955 = vsel %vm953, %v798, -1e+30
    %v956 = vsel %vm953, %v803, -1e+30
    %v957 = vsel %vm953, %v808, -1e+30
    %v958 = vsel %vm953, %v813, -1e+30
    %v959 = vsel %vm953, %v818, -1e+30
    %v960 = vsel %vm953, %v823, -1e+30
    %v961 = vsel %vm953, %v828, -1e+30
    %v962 = vsel %vm953, %v833, -1e+30
    %v963 = vsel %vm953, %v838, -1e+30
    %v964 = vsel %vm953, %v843, -1e+30
    %v965 = vsel %vm953, %v848, -1e+30
    %v966 = vsel %vm953, %v853, -1e+30
    %v967 = vsel %vm953, %v858, -1e+30
    %v968 = vsel %vm953, %v863, -1e+30
    %v969 = vsel %vm953, %v868, -1e+30
    %v970 = vsel %vm953, %v873, -1e+30
    %v971 = vsel %vm953, %v878, -1e+30
    %v972 = vsel %vm953, %v883, -1e+30
    %v973 = vsel %vm953, %v888, -1e+30
    %v974 = vsel %vm953, %v893, -1e+30
    %v975 = vsel %vm953, %v898, -1e+30
    %v976 = vsel %vm953, %v903, -1e+30
    %v977 = vsel %vm953, %v908, -1e+30
    %v978 = vsel %vm953, %v913, -1e+30
    %v979 = vsel %vm953, %v918, -1e+30
    %v980 = vsel %vm953, %v923, -1e+30
    %v981 = vsel %vm953, %v928, -1e+30
    %v982 = vsel %vm953, %v933, -1e+30
    %v983 = vsel %vm953, %v938, -1e+30
    %v984 = vsel %vm953, %v943, -1e+30
    %v985 = vsel %vm953, %v948, -1e+30
    %986 = vmax.xlane.f32.xlu0 %v954
    %v987 = vpop.xlane.xlu0 %986
    %988 = vmax.xlane.f32.xlu0 %v955
    %v989 = vpop.xlane.xlu0 %988
    %990 = vmax.xlane.f32.xlu0 %v956
    %v991 = vpop.xlane.xlu0 %990
    %992 = vmax.xlane.f32.xlu0 %v957
    %v993 = vpop.xlane.xlu0 %992
    %994 = vmax.xlane.f32.xlu0 %v958
    %v995 = vpop.xlane.xlu0 %994
    %996 = vmax.xlane.f32.xlu0 %v959
    %v997 = vpop.xlane.xlu0 %996
    %998 = vmax.xlane.f32.xlu0 %v960
    %v999 = vpop.xlane.xlu0 %998
    %1000 = vmax.xlane.f32.xlu0 %v961
    %v1001 = vpop.xlane.xlu0 %1000
    %1002 = vmax.xlane.f32.xlu0 %v962
    %v1003 = vpop.xlane.xlu0 %1002
    %1004 = vmax.xlane.f32.xlu0 %v963
    %v1005 = vpop.xlane.xlu0 %1004
    %1006 = vmax.xlane.f32.xlu0 %v964
    %v1007 = vpop.xlane.xlu0 %1006
    %1008 = vmax.xlane.f32.xlu0 %v965
    %v1009 = vpop.xlane.xlu0 %1008
    %1010 = vmax.xlane.f32.xlu0 %v966
    %v1011 = vpop.xlane.xlu0 %1010
    %1012 = vmax.xlane.f32.xlu0 %v967
    %v1013 = vpop.xlane.xlu0 %1012
    %1014 = vmax.xlane.f32.xlu0 %v968
    %v1015 = vpop.xlane.xlu0 %1014
    %1016 = vmax.xlane.f32.xlu0 %v969
    %v1017 = vpop.xlane.xlu0 %1016
    %1018 = vmax.xlane.f32.xlu0 %v970
    %v1019 = vpop.xlane.xlu0 %1018
    %1020 = vmax.xlane.f32.xlu0 %v971
    %v1021 = vpop.xlane.xlu0 %1020
    %1022 = vmax.xlane.f32.xlu0 %v972
    %v1023 = vpop.xlane.xlu0 %1022
    %1024 = vmax.xlane.f32.xlu0 %v973
    %v1025 = vpop.xlane.xlu0 %1024
    %1026 = vmax.xlane.f32.xlu0 %v974
    %v1027 = vpop.xlane.xlu0 %1026
    %1028 = vmax.xlane.f32.xlu0 %v975
    %v1029 = vpop.xlane.xlu0 %1028
    %1030 = vmax.xlane.f32.xlu0 %v976
    %v1031 = vpop.xlane.xlu0 %1030
    %1032 = vmax.xlane.f32.xlu0 %v977
    %v1033 = vpop.xlane.xlu0 %1032
    %1034 = vmax.xlane.f32.xlu0 %v978
    %v1035 = vpop.xlane.xlu0 %1034
    %1036 = vmax.xlane.f32.xlu0 %v979
    %v1037 = vpop.xlane.xlu0 %1036
    %1038 = vmax.xlane.f32.xlu0 %v980
    %v1039 = vpop.xlane.xlu0 %1038
    %1040 = vmax.xlane.f32.xlu0 %v981
    %v1041 = vpop.xlane.xlu0 %1040
    %1042 = vmax.xlane.f32.xlu0 %v982
    %v1043 = vpop.xlane.xlu0 %1042
    %1044 = vmax.xlane.f32.xlu0 %v983
    %v1045 = vpop.xlane.xlu0 %1044
    %1046 = vmax.xlane.f32.xlu0 %v984
    %v1047 = vpop.xlane.xlu0 %1046
    %1048 = vmax.xlane.f32.xlu0 %v985
    %v1049 = vpop.xlane.xlu0 %1048
    %v1050 = vsub.f32 %v954, %v987
    %v1051 = vsub.f32 %v955, %v989
    %v1052 = vsub.f32 %v956, %v991
    %v1053 = vsub.f32 %v957, %v993
    %v1054 = vsub.f32 %v958, %v995
    %v1055 = vsub.f32 %v959, %v997
    %v1056 = vsub.f32 %v960, %v999
    %v1057 = vsub.f32 %v961, %v1001
    %v1058 = vsub.f32 %v962, %v1003
    %v1059 = vsub.f32 %v963, %v1005
    %v1060 = vsub.f32 %v964, %v1007
    %v1061 = vsub.f32 %v965, %v1009
    %v1062 = vsub.f32 %v966, %v1011
    %v1063 = vsub.f32 %v967, %v1013
    %v1064 = vsub.f32 %v968, %v1015
    %v1065 = vsub.f32 %v969, %v1017
    %v1066 = vsub.f32 %v970, %v1019
    %v1067 = vsub.f32 %v971, %v1021
    %v1068 = vsub.f32 %v972, %v1023
    %v1069 = vsub.f32 %v973, %v1025
    %v1070 = vsub.f32 %v974, %v1027
    %v1071 = vsub.f32 %v975, %v1029
    %v1072 = vsub.f32 %v976, %v1031
    %v1073 = vsub.f32 %v977, %v1033
    %v1074 = vsub.f32 %v978, %v1035
    %v1075 = vsub.f32 %v979, %v1037
    %v1076 = vsub.f32 %v980, %v1039
    %v1077 = vsub.f32 %v981, %v1041
    %v1078 = vsub.f32 %v982, %v1043
    %v1079 = vsub.f32 %v983, %v1045
    %v1080 = vsub.f32 %v984, %v1047
    %v1081 = vsub.f32 %v985, %v1049
    %v1082 = vmul.f32 %v1050, 1.442695
    %v1083 = vpow.pop %v1082
    %v1084 = vmul.f32 %v1051, 1.442695
    %v1085 = vpow.pop %v1084
    %v1086 = vmul.f32 %v1052, 1.442695
    %v1087 = vpow.pop %v1086
    %v1088 = vmul.f32 %v1053, 1.442695
    %v1089 = vpow.pop %v1088
    %v1090 = vmul.f32 %v1054, 1.442695
    %v1091 = vpow.pop %v1090
    %v1092 = vmul.f32 %v1055, 1.442695
    %v1093 = vpow.pop %v1092
    %v1094 = vmul.f32 %v1056, 1.442695
    %v1095 = vpow.pop %v1094
    %v1096 = vmul.f32 %v1057, 1.442695
    %v1097 = vpow.pop %v1096
    %v1098 = vmul.f32 %v1058, 1.442695
    %v1099 = vpow.pop %v1098
    %v1100 = vmul.f32 %v1059, 1.442695
    %v1101 = vpow.pop %v1100
    %v1102 = vmul.f32 %v1060, 1.442695
    %v1103 = vpow.pop %v1102
    %v1104 = vmul.f32 %v1061, 1.442695
    %v1105 = vpow.pop %v1104
    %v1106 = vmul.f32 %v1062, 1.442695
    %v1107 = vpow.pop %v1106
    %v1108 = vmul.f32 %v1063, 1.442695
    %v1109 = vpow.pop %v1108
    %v1110 = vmul.f32 %v1064, 1.442695
    %v1111 = vpow.pop %v1110
    %v1112 = vmul.f32 %v1065, 1.442695
    %v1113 = vpow.pop %v1112
    %v1114 = vmul.f32 %v1066, 1.442695
    %v1115 = vpow.pop %v1114
    %v1116 = vmul.f32 %v1067, 1.442695
    %v1117 = vpow.pop %v1116
    %v1118 = vmul.f32 %v1068, 1.442695
    %v1119 = vpow.pop %v1118
    %v1120 = vmul.f32 %v1069, 1.442695
    %v1121 = vpow.pop %v1120
    %v1122 = vmul.f32 %v1070, 1.442695
    %v1123 = vpow.pop %v1122
    %v1124 = vmul.f32 %v1071, 1.442695
    %v1125 = vpow.pop %v1124
    %v1126 = vmul.f32 %v1072, 1.442695
    %v1127 = vpow.pop %v1126
    %v1128 = vmul.f32 %v1073, 1.442695
    %v1129 = vpow.pop %v1128
    %v1130 = vmul.f32 %v1074, 1.442695
    %v1131 = vpow.pop %v1130
    %v1132 = vmul.f32 %v1075, 1.442695
    %v1133 = vpow.pop %v1132
    %v1134 = vmul.f32 %v1076, 1.442695
    %v1135 = vpow.pop %v1134
    %v1136 = vmul.f32 %v1077, 1.442695
    %v1137 = vpow.pop %v1136
    %v1138 = vmul.f32 %v1078, 1.442695
    %v1139 = vpow.pop %v1138
    %v1140 = vmul.f32 %v1079, 1.442695
    %v1141 = vpow.pop %v1140
    %v1142 = vmul.f32 %v1080, 1.442695
    %v1143 = vpow.pop %v1142
    %v1144 = vmul.f32 %v1081, 1.442695
    %v1145 = vpow.pop %v1144
    %1146 = vadd.xlane.f32.xlu0 %v1083
    %v1147 = vpop.xlane.xlu0 %1146
    %1148 = vadd.xlane.f32.xlu0 %v1085
    %v1149 = vpop.xlane.xlu0 %1148
    %1150 = vadd.xlane.f32.xlu0 %v1087
    %v1151 = vpop.xlane.xlu0 %1150
    %1152 = vadd.xlane.f32.xlu0 %v1089
    %v1153 = vpop.xlane.xlu0 %1152
    %1154 = vadd.xlane.f32.xlu0 %v1091
    %v1155 = vpop.xlane.xlu0 %1154
    %1156 = vadd.xlane.f32.xlu0 %v1093
    %v1157 = vpop.xlane.xlu0 %1156
    %1158 = vadd.xlane.f32.xlu0 %v1095
    %v1159 = vpop.xlane.xlu0 %1158
    %1160 = vadd.xlane.f32.xlu0 %v1097
    %v1161 = vpop.xlane.xlu0 %1160
    %1162 = vadd.xlane.f32.xlu0 %v1099
    %v1163 = vpop.xlane.xlu0 %1162
    %1164 = vadd.xlane.f32.xlu0 %v1101
    %v1165 = vpop.xlane.xlu0 %1164
    %1166 = vadd.xlane.f32.xlu0 %v1103
    %v1167 = vpop.xlane.xlu0 %1166
    %1168 = vadd.xlane.f32.xlu0 %v1105
    %v1169 = vpop.xlane.xlu0 %1168
    %1170 = vadd.xlane.f32.xlu0 %v1107
    %v1171 = vpop.xlane.xlu0 %1170
    %1172 = vadd.xlane.f32.xlu0 %v1109
    %v1173 = vpop.xlane.xlu0 %1172
    %1174 = vadd.xlane.f32.xlu0 %v1111
    %v1175 = vpop.xlane.xlu0 %1174
    %1176 = vadd.xlane.f32.xlu0 %v1113
    %v1177 = vpop.xlane.xlu0 %1176
    %1178 = vadd.xlane.f32.xlu0 %v1115
    %v1179 = vpop.xlane.xlu0 %1178
    %1180 = vadd.xlane.f32.xlu0 %v1117
    %v1181 = vpop.xlane.xlu0 %1180
    %1182 = vadd.xlane.f32.xlu0 %v1119
    %v1183 = vpop.xlane.xlu0 %1182
    %1184 = vadd.xlane.f32.xlu0 %v1121
    %v1185 = vpop.xlane.xlu0 %1184
    %1186 = vadd.xlane.f32.xlu0 %v1123
    %v1187 = vpop.xlane.xlu0 %1186
    %1188 = vadd.xlane.f32.xlu0 %v1125
    %v1189 = vpop.xlane.xlu0 %1188
    %1190 = vadd.xlane.f32.xlu0 %v1127
    %v1191 = vpop.xlane.xlu0 %1190
    %1192 = vadd.xlane.f32.xlu0 %v1129
    %v1193 = vpop.xlane.xlu0 %1192
    %1194 = vadd.xlane.f32.xlu0 %v1131
    %v1195 = vpop.xlane.xlu0 %1194
    %1196 = vadd.xlane.f32.xlu0 %v1133
    %v1197 = vpop.xlane.xlu0 %1196
    %1198 = vadd.xlane.f32.xlu0 %v1135
    %v1199 = vpop.xlane.xlu0 %1198
    %1200 = vadd.xlane.f32.xlu0 %v1137
    %v1201 = vpop.xlane.xlu0 %1200
    %1202 = vadd.xlane.f32.xlu0 %v1139
    %v1203 = vpop.xlane.xlu0 %1202
    %1204 = vadd.xlane.f32.xlu0 %v1141
    %v1205 = vpop.xlane.xlu0 %1204
    %1206 = vadd.xlane.f32.xlu0 %v1143
    %v1207 = vpop.xlane.xlu0 %1206
    %1208 = vadd.xlane.f32.xlu0 %v1145
    %v1209 = vpop.xlane.xlu0 %1208
    %v1210 = vrcp.pop %v1147
    %v1211 = vrcp.pop %v1149
    %v1212 = vrcp.pop %v1151
    %v1213 = vrcp.pop %v1153
    %v1214 = vrcp.pop %v1155
    %v1215 = vrcp.pop %v1157
    %v1216 = vrcp.pop %v1159
    %v1217 = vrcp.pop %v1161
    %v1218 = vrcp.pop %v1163
    %v1219 = vrcp.pop %v1165
    %v1220 = vrcp.pop %v1167
    %v1221 = vrcp.pop %v1169
    %v1222 = vrcp.pop %v1171
    %v1223 = vrcp.pop %v1173
    %v1224 = vrcp.pop %v1175
    %v1225 = vrcp.pop %v1177
    %v1226 = vrcp.pop %v1179
    %v1227 = vrcp.pop %v1181
    %v1228 = vrcp.pop %v1183
    %v1229 = vrcp.pop %v1185
    %v1230 = vrcp.pop %v1187
    %v1231 = vrcp.pop %v1189
    %v1232 = vrcp.pop %v1191
    %v1233 = vrcp.pop %v1193
    %v1234 = vrcp.pop %v1195
    %v1235 = vrcp.pop %v1197
    %v1236 = vrcp.pop %v1199
    %v1237 = vrcp.pop %v1201
    %v1238 = vrcp.pop %v1203
    %v1239 = vrcp.pop %v1205
    %v1240 = vrcp.pop %v1207
    %v1241 = vrcp.pop %v1209
    %v1242 = vmul.f32 %v1083, %v1210
    %v1243 = vmul.f32 %v1085, %v1211
    %v1244 = vmul.f32 %v1087, %v1212
    %v1245 = vmul.f32 %v1089, %v1213
    %v1246 = vmul.f32 %v1091, %v1214
    %v1247 = vmul.f32 %v1093, %v1215
    %v1248 = vmul.f32 %v1095, %v1216
    %v1249 = vmul.f32 %v1097, %v1217
    %v1250 = vmul.f32 %v1099, %v1218
    %v1251 = vmul.f32 %v1101, %v1219
    %v1252 = vmul.f32 %v1103, %v1220
    %v1253 = vmul.f32 %v1105, %v1221
    %v1254 = vmul.f32 %v1107, %v1222
    %v1255 = vmul.f32 %v1109, %v1223
    %v1256 = vmul.f32 %v1111, %v1224
    %v1257 = vmul.f32 %v1113, %v1225
    %v1258 = vmul.f32 %v1115, %v1226
    %v1259 = vmul.f32 %v1117, %v1227
    %v1260 = vmul.f32 %v1119, %v1228
    %v1261 = vmul.f32 %v1121, %v1229
    %v1262 = vmul.f32 %v1123, %v1230
    %v1263 = vmul.f32 %v1125, %v1231
    %v1264 = vmul.f32 %v1127, %v1232
    %v1265 = vmul.f32 %v1129, %v1233
    %v1266 = vmul.f32 %v1131, %v1234
    %v1267 = vmul.f32 %v1133, %v1235
    %v1268 = vmul.f32 %v1135, %v1236
    %v1269 = vmul.f32 %v1137, %v1237
    %v1270 = vmul.f32 %v1139, %v1238
    %v1271 = vmul.f32 %v1141, %v1239
    %v1272 = vmul.f32 %v1143, %v1240
    %v1273 = vmul.f32 %v1145, %v1241
    %1274 = vst [vmem:[#allocation2] sm:$0xff] %v793
    %1275 = vst [vmem:[#allocation2 + $0x10] sm:$0xff] %v798
    %1276 = vst [vmem:[#allocation2 + $0x20] sm:$0xff] %v803
    %1277 = vst [vmem:[#allocation2 + $0x30] sm:$0xff] %v808
    %1278 = vst [vmem:[#allocation2 + $0x40] sm:$0xff] %v813
    %1279 = vst [vmem:[#allocation2 + $0x50] sm:$0xff] %v818
    %1280 = vst [vmem:[#allocation2 + $0x60] sm:$0xff] %v823
    %1281 = vst [vmem:[#allocation2 + $0x70] sm:$0xff] %v828
    %1282 = vst [vmem:[#allocation2 + $0x80] sm:$0xff] %v833
    %1283 = vst [vmem:[#allocation2 + $0x90] sm:$0xff] %v838
    %1284 = vst [vmem:[#allocation2 + $0xa0] sm:$0xff] %v843
    %1285 = vst [vmem:[#allocation2 + $0xb0] sm:$0xff] %v848
    %1286 = vst [vmem:[#allocation2 + $0xc0] sm:$0xff] %v853
    %1287 = vst [vmem:[#allocation2 + $0xd0] sm:$0xff] %v858
    %1288 = vst [vmem:[#allocation2 + $0xe0] sm:$0xff] %v863
    %1289 = vst [vmem:[#allocation2 + $0xf0] sm:$0xff] %v868
    %1290 = vst [vmem:[#allocation2 + $0x100] sm:$0xff] %v873
    %1291 = vst [vmem:[#allocation2 + $0x110] sm:$0xff] %v878
    %1292 = vst [vmem:[#allocation2 + $0x120] sm:$0xff] %v883
    %1293 = vst [vmem:[#allocation2 + $0x130] sm:$0xff] %v888
    %1294 = vst [vmem:[#allocation2 + $0x140] sm:$0xff] %v893
    %1295 = vst [vmem:[#allocation2 + $0x150] sm:$0xff] %v898
    %1296 = vst [vmem:[#allocation2 + $0x160] sm:$0xff] %v903
    %1297 = vst [vmem:[#allocation2 + $0x170] sm:$0xff] %v908
    %1298 = vst [vmem:[#allocation2 + $0x180] sm:$0xff] %v913
    %1299 = vst [vmem:[#allocation2 + $0x190] sm:$0xff] %v918
    %1300 = vst [vmem:[#allocation2 + $0x1a0] sm:$0xff] %v923
    %1301 = vst [vmem:[#allocation2 + $0x1b0] sm:$0xff] %v928
    %1302 = vst [vmem:[#allocation2 + $0x1c0] sm:$0xff] %v933
    %1303 = vst [vmem:[#allocation2 + $0x1d0] sm:$0xff] %v938
    %1304 = vst [vmem:[#allocation2 + $0x1e0] sm:$0xff] %v943
    %1305 = vst [vmem:[#allocation2 + $0x1f0] sm:$0xff] %v948
    %1306 = vst [vmem:[#allocation2 + $0x8] sm:$0xff] %v1242
    %1307 = vst [vmem:[#allocation2 + $0x18] sm:$0xff] %v1243
    %1308 = vst [vmem:[#allocation2 + $0x28] sm:$0xff] %v1244
    %1309 = vst [vmem:[#allocation2 + $0x38] sm:$0xff] %v1245
    %1310 = vst [vmem:[#allocation2 + $0x48] sm:$0xff] %v1246
    %1311 = vst [vmem:[#allocation2 + $0x58] sm:$0xff] %v1247
    %1312 = vst [vmem:[#allocation2 + $0x68] sm:$0xff] %v1248
    %1313 = vst [vmem:[#allocation2 + $0x78] sm:$0xff] %v1249
    %1314 = vst [vmem:[#allocation2 + $0x88] sm:$0xff] %v1250
    %1315 = vst [vmem:[#allocation2 + $0x98] sm:$0xff] %v1251
    %1316 = vst [vmem:[#allocation2 + $0xa8] sm:$0xff] %v1252
    %1317 = vst [vmem:[#allocation2 + $0xb8] sm:$0xff] %v1253
    %1318 = vst [vmem:[#allocation2 + $0xc8] sm:$0xff] %v1254
    %1319 = vst [vmem:[#allocation2 + $0xd8] sm:$0xff] %v1255
    %1320 = vst [vmem:[#allocation2 + $0xe8] sm:$0xff] %v1256
    %1321 = vst [vmem:[#allocation2 + $0xf8] sm:$0xff] %v1257
    %1322 = vst [vmem:[#allocation2 + $0x108] sm:$0xff] %v1258
    %1323 = vst [vmem:[#allocation2 + $0x118] sm:$0xff] %v1259
    %1324 = vst [vmem:[#allocation2 + $0x128] sm:$0xff] %v1260
    %1325 = vst [vmem:[#allocation2 + $0x138] sm:$0xff] %v1261
    %1326 = vst [vmem:[#allocation2 + $0x148] sm:$0xff] %v1262
    %1327 = vst [vmem:[#allocation2 + $0x158] sm:$0xff] %v1263
    %1328 = vst [vmem:[#allocation2 + $0x168] sm:$0xff] %v1264
    %1329 = vst [vmem:[#allocation2 + $0x178] sm:$0xff] %v1265
    %1330 = vst [vmem:[#allocation2 + $0x188] sm:$0xff] %v1266
    %1331 = vst [vmem:[#allocation2 + $0x198] sm:$0xff] %v1267
    %1332 = vst [vmem:[#allocation2 + $0x1a8] sm:$0xff] %v1268
    %1333 = vst [vmem:[#allocation2 + $0x1b8] sm:$0xff] %v1269
    %1334 = vst [vmem:[#allocation2 + $0x1c8] sm:$0xff] %v1270
    %1335 = vst [vmem:[#allocation2 + $0x1d8] sm:$0xff] %v1271
    %1336 = vst [vmem:[#allocation2 + $0x1e8] sm:$0xff] %v1272
    %1337 = vst [vmem:[#allocation2 + $0x1f8] sm:$0xff] %v1273
    // Predicated region
    $region30: #{tpu_custom_call.1} parent=1 // pred_check
      _
    $region31: #{tpu_custom_call.1} parent=1 // pred_check_branch
      %1339 = sbr.rel (0) target = $region33
    $region32: #{tpu_custom_call.1} parent=1 // pred_region
      %s1341 = ssub.s32 8192, 8192
      %1342 = vsyncadd [#allocation3], %s1341
      %s1343 = sshll.u32 [#allocation2], 4
      %s1344 = int_to_ptr.vmem [resolvable:$true] %s1343
      %1349 = dma.vmem_to_hbm [thread:$0]  %s1344, 8192, %s7, [#allocation3], 256, 256, 16
    $region33: #{tpu_custom_call.1} parent=1 // pred_fallthru
      _
    // Predicated region
    $region34: #{tpu_custom_call.1} parent=1 // pred_check
      _
    $region35: #{tpu_custom_call.1} parent=1 // pred_check_branch
      %1351 = sbr.rel (0) target = $region37
    $region36: #{tpu_custom_call.1} parent=1 // pred_region
      %1352 = dma.done [#allocation3], 8192
    $region37: #{tpu_custom_call.1} parent=1 // pred_fallthru
      _
    %1353 = vsyncpa [#allocation3], 1

</llo_original>
